<compile_context>
chip_gen: v7x
topology: tpu7x:2x2x1
jax: 0.10.0
libtpu: 0.0.40
codegen_flags: <defaults>
</compile_context>

<pallas_src>
import numpy as np
import jax
import jax.numpy as jnp
from jax import lax
from jax.experimental import pallas as pl
from jax.experimental.pallas import tpu as pltpu


def rl_model_forward(encoder_output, entity_output, noisy_sentences_vec,
                     noisy_vec_mean, RE_output_tag, relation_target_tensor,
                     params, *, tb=8):
    """Returns (RE_rewards, loss_RL, noisy_sentences_vec_buf, noisy_count,
                noisy_vec_mean, mem, re_argmax, prob_noisy)."""
    del relation_target_tensor  # consumed only by the undefined external Optimize
    B, D = encoder_output.shape
    w_mem, b_mem, w_prob, b_prob = params
    f32 = jnp.float32

    # ---- trace-time weight plumbing: fuse the 8 per-step matmuls ----
    # static (carry-independent) head:  enc_i, ent_i      -> [h | logits]
    w_static_enc = jnp.concatenate([w_mem[0], w_prob[0]], axis=1)   # [D, D+2]
    w_static_ent = jnp.concatenate([w_mem[1], w_prob[1]], axis=1)   # [D, D+2]
    # carry-dependent head:             [mean | mem]      -> [h | logits]
    w_carry = jnp.concatenate(
        [jnp.concatenate([w_mem[2], w_prob[2]], axis=1),
         jnp.concatenate([w_mem[3], w_prob[3]], axis=1)], axis=0)   # [2D, D+2]
    b_all = jnp.concatenate([b_mem, b_prob], axis=1)                # [1, D+2]

    if B % tb != 0:
        tb = B                      # fall back to a single tile
    nb = B // tb
    unroll = True if tb <= 16 else 4

    def kernel(enc_ref, ent_ref, init_noisy_ref, init_mean_ref,
               w_se_ref, w_sn_ref, w_carry_ref, b_ref,
               mem_out_ref, mean_out_ref, buf_out_ref, count_out_ref, prob_out_ref,
               mem_sc, mean_sc, ssum_sc, count_sc, static_sc):
        t = pl.program_id(0)

        # ---- one-time state init on the first tile ----
        @pl.when(t == 0)
        def _():
            init_row = init_noisy_ref[...]                          # [1, D]
            zero_row = jnp.zeros_like(init_row)
            nz = jnp.sum(init_row) != 0.0      # `if torch.sum(noisy_sentences_vec)`
            buf_out_ref[...] = jnp.zeros_like(buf_out_ref)
            buf_out_ref[pl.ds(0, 1), :] = jnp.where(nz, init_row, zero_row)
            ssum_sc[...] = jnp.where(nz, init_row, zero_row)
            mem_sc[...] = zero_row
            mean_sc[...] = init_mean_ref[...]
            count_sc[0] = jnp.where(nz, jnp.int32(1), jnp.int32(0))

        # ---- carry-independent pre-activations: one batched MXU pass per tile ----
        static_sc[...] = (
            jnp.dot(enc_ref[...], w_se_ref[...], preferred_element_type=f32)
            + jnp.dot(ent_ref[...], w_sn_ref[...], preferred_element_type=f32)
            + b_ref[...])                                           # [TB, D+2]

        w_carry_v = w_carry_ref[...]        # hoisted out of the recurrence

        mem0 = mem_sc[...]
        mean0 = mean_sc[...]
        ssum0 = ssum_sc[...]
        count0 = count_sc[0]

        def body(i, carry):
            mem, mean, ssum, count = carry
            stat_i = static_sc[pl.ds(i, 1), :]                      # [1, D+2]
            dyn = jnp.dot(jnp.concatenate([mean, mem], axis=1), w_carry_v,
                          preferred_element_type=f32)               # one dot / step
            full = stat_i + dyn
            h = full[:, :D]                                         # [1, D]
            logits = full[:, D:]                                    # [1, 2]
            mem_new = jnp.tanh(h)

            # stage raw logits; softmax is done once per tile after the loop
            prob_out_ref[pl.ds(i, 1), :] = logits

            # softmax(logits)[1] > 0.5  <=>  logits[1] > logits[0]  (strict, tie excluded)
            selected = logits[0, 1] > logits[0, 0]
            enc_i = enc_ref[pl.ds(i, 1), :]

            @pl.when(selected)
            def _():
                buf_out_ref[pl.ds(count, 1), :] = enc_i

            ssum_new = jnp.where(selected, ssum + enc_i, ssum)
            count_new = jnp.where(selected, count + 1, count)
            mean_new = jnp.where(
                selected, ssum_new / jnp.maximum(count_new, 1).astype(f32), mean)
            return mem_new, mean_new, ssum_new, count_new

        mem_f, mean_f, ssum_f, count_f = lax.fori_loop(
            0, tb, body, (mem0, mean0, ssum0, count0), unroll=unroll)

        # carry state across grid steps
        mem_sc[...] = mem_f
        mean_sc[...] = mean_f
        ssum_sc[...] = ssum_f
        count_sc[0] = count_f

        # ---- batched softmax over this tile's logits (off the serial chain) ----
        lg = prob_out_ref[...]                                      # [TB, 2]
        m = jnp.max(lg, axis=-1, keepdims=True)
        e = jnp.exp(lg - m)
        prob_out_ref[...] = e * pl.reciprocal(
            jnp.sum(e, axis=-1, keepdims=True), approx=True)

        @pl.when(t == pl.num_programs(0) - 1)
        def _():
            mem_out_ref[...] = mem_f
            mean_out_ref[...] = mean_f
            count_out_ref[...] = jnp.reshape(count_f, (1, 1))

    out_shape = (
        jax.ShapeDtypeStruct((1, D), f32),         # final mem
        jax.ShapeDtypeStruct((1, D), f32),         # noisy_vec_mean
        jax.ShapeDtypeStruct((B + 1, D), f32),     # noisy_sentences_vec (padded)
        jax.ShapeDtypeStruct((1, 1), jnp.int32),   # number of valid rows above
        jax.ShapeDtypeStruct((B, 2), f32),         # prob_noisy per sentence
    )

    grid_spec = pltpu.PrefetchScalarGridSpec(
        num_scalar_prefetch=0,
        grid=(nb,),
        in_specs=[
            pl.BlockSpec((tb, D), lambda t: (t, 0)),          # encoder_output tile
            pl.BlockSpec((tb, D), lambda t: (t, 0)),          # entity_output tile
            pl.BlockSpec((1, D), lambda t: (0, 0)),           # init noisy row
            pl.BlockSpec((1, D), lambda t: (0, 0)),           # init mean
            pl.BlockSpec((D, D + 2), lambda t: (0, 0)),       # w_static_enc
            pl.BlockSpec((D, D + 2), lambda t: (0, 0)),       # w_static_ent
            pl.BlockSpec((2 * D, D + 2), lambda t: (0, 0)),   # w_carry
            pl.BlockSpec((1, D + 2), lambda t: (0, 0)),       # b_all
        ],
        out_specs=[
            pl.BlockSpec((1, D), lambda t: (0, 0)),           # mem (written last step)
            pl.BlockSpec((1, D), lambda t: (0, 0)),           # mean (written last step)
            pl.BlockSpec((B + 1, D), lambda t: (0, 0)),       # buf (resident across grid)
            pl.BlockSpec((1, 1), lambda t: (0, 0)),           # count
            pl.BlockSpec((tb, 2), lambda t: (t, 0)),          # probs tile
        ],
        scratch_shapes=[
            pltpu.VMEM((1, D), f32),        # mem carry
            pltpu.VMEM((1, D), f32),        # mean carry
            pltpu.VMEM((1, D), f32),        # running sum of noisy rows
            pltpu.SMEM((1,), jnp.int32),    # count carry
            pltpu.VMEM((tb, D + 2), f32),   # static (carry-independent) pre-acts
        ],
    )

    outs = pl.pallas_call(
        kernel,
        out_shape=out_shape,
        grid_spec=grid_spec,
        compiler_params=pltpu.CompilerParams(
            dimension_semantics=("arbitrary",),
            vmem_limit_bytes=32 * 1024 * 1024),
    )(encoder_output, entity_output, noisy_sentences_vec, noisy_vec_mean,
      w_static_enc, w_static_ent, w_carry, b_all)

    mem_f, mean_f, buf, count, prob_noisy = outs

    # argmax(RE_output_tag, -1) is independent of the recurrence -> plain XLA op
    re_argmax = jnp.argmax(RE_output_tag, axis=-1).astype(jnp.int32).reshape(B, 1)

    loss_RL = 0.0      # TODO(synk): would come from the external Optimize.optimize_each
    RE_rewards = []    # loss_RL == 0.0  ->  no reward appended (reference branch)
    return RE_rewards, loss_RL, buf, count, mean_f, mem_f, re_argmax, prob_noisy


def _numpy_reference(enc, ent, init_noisy, init_mean, re_tag, params):
    w_mem, b_mem, w_prob, b_prob = [np.asarray(p, np.float32) for p in params]
    enc, ent = np.asarray(enc, np.float32), np.asarray(ent, np.float32)
    init_noisy = np.asarray(init_noisy, np.float32)
    init_mean = np.asarray(init_mean, np.float32)
    B, D = enc.shape
    buf = np.zeros((B + 1, D), np.float32)
    if float(init_noisy.sum()) != 0.0:
        buf[0] = init_noisy[0]
        count, ssum = 1, init_noisy.copy()
    else:
        count, ssum = 0, np.zeros((1, D), np.float32)
    mem = np.zeros((1, D), np.float32)
    mean = init_mean.copy()
    probs_all = np.zeros((B, 2), np.float32)
    for i in range(B):
        e_i, n_i = enc[i:i + 1], ent[i:i + 1]
        logits = (e_i @ w_prob[0] + n_i @ w_prob[1] + mean @ w_prob[2]
                  + mem @ w_prob[3] + b_prob)
        h = (e_i @ w_mem[0] + n_i @ w_mem[1] + mean @ w_mem[2]
             + mem @ w_mem[3] + b_mem)
        mem = np.tanh(h)
        logits = logits - logits.max()
        p = np.exp(logits); p = p / p.sum()
        probs_all[i] = p[0]
        if p[0, 1] > 0.5:
            buf[count] = e_i[0]
            ssum = ssum + e_i
            count += 1
            mean = ssum / count
    re_argmax = np.argmax(np.asarray(re_tag), axis=-1).reshape(B, 1).astype(np.int32)
    return mem, mean, buf, count, re_argmax, probs_all


if __name__ == "__main__":
    B, D, R = 16, 128, 8          # lane-dense D; B tiled as 2 x tb=8 grid steps
    key = jax.random.PRNGKey(0)
    k1, k2, k3, k4, k5, k6, k7 = jax.random.split(key, 7)

    encoder_output = jax.random.normal(k1, (B, D), jnp.float32)
    entity_output = jax.random.normal(k2, (B, D), jnp.float32)
    noisy_sentences_vec = jnp.zeros((1, D), jnp.float32)   # "empty" as in torch
    noisy_vec_mean = jnp.zeros((1, D), jnp.float32)
    RE_output_tag = jax.random.normal(k3, (B, R), jnp.float32)
    relation_target_tensor = jax.random.randint(k4, (B,), 0, R)

    # deterministic synthetic noisy_model parameters
    w_mem = jax.random.normal(k5, (4, D, D), jnp.float32) * (0.3 / np.sqrt(D))
    b_mem = jnp.zeros((1, D), jnp.float32)
    w_prob = jax.random.normal(k6, (4, D, 2), jnp.float32) * (0.5 / np.sqrt(D))
    b_prob = jax.random.normal(k7, (1, 2), jnp.float32) * 0.1
    params = (w_mem, b_mem, w_prob, b_prob)

    out = rl_model_forward(encoder_output, entity_output, noisy_sentences_vec,
                           noisy_vec_mean, RE_output_tag, relation_target_tensor,
                           params, tb=8)
    jax.block_until_ready(out)
    RE_rewards, loss_RL, buf, count, mean_f, mem_f, re_argmax, prob_noisy = out

    # correctness check against a pure-numpy reference of the same recurrence
    ref_mem, ref_mean, ref_buf, ref_count, ref_argmax, ref_probs = _numpy_reference(
        encoder_output, entity_output, noisy_sentences_vec, noisy_vec_mean,
        RE_output_tag, params)
    np.testing.assert_allclose(np.asarray(mem_f), ref_mem, rtol=2e-3, atol=2e-3)
    np.testing.assert_allclose(np.asarray(mean_f), ref_mean, rtol=2e-3, atol=2e-3)
    np.testing.assert_allclose(np.asarray(buf), ref_buf, rtol=2e-3, atol=2e-3)
    np.testing.assert_allclose(np.asarray(prob_noisy), ref_probs, rtol=2e-3, atol=2e-3)
    assert int(np.asarray(count)[0, 0]) == ref_count
    np.testing.assert_array_equal(np.asarray(re_argmax), ref_argmax)

    print("KERNEL_OK")
</pallas_src>

<mosaic_0001>
module attributes {stable_mosaic.version = 11 : i64} {
  func.func @kernel(%arg0: i32, %arg1: memref<8x128xf32, #tpu.memory_space<vmem>>, %arg2: memref<8x128xf32, #tpu.memory_space<vmem>>, %arg3: memref<1x128xf32, #tpu.memory_space<vmem>>, %arg4: memref<1x128xf32, #tpu.memory_space<vmem>>, %arg5: memref<128x130xf32, #tpu.memory_space<vmem>>, %arg6: memref<128x130xf32, #tpu.memory_space<vmem>>, %arg7: memref<256x130xf32, #tpu.memory_space<vmem>>, %arg8: memref<1x130xf32, #tpu.memory_space<vmem>>, %arg9: memref<1x128xf32, #tpu.memory_space<vmem>>, %arg10: memref<1x128xf32, #tpu.memory_space<vmem>>, %arg11: memref<17x128xf32, #tpu.memory_space<vmem>>, %arg12: memref<1x1xi32, #tpu.memory_space<vmem>>, %arg13: memref<8x2xf32, #tpu.memory_space<vmem>>, %arg14: memref<1x128xf32, #tpu.memory_space<vmem>>, %arg15: memref<1x128xf32, #tpu.memory_space<vmem>>, %arg16: memref<1x128xf32, #tpu.memory_space<vmem>>, %arg17: memref<1xi32, #tpu.memory_space<smem>>, %arg18: memref<8x130xf32, #tpu.memory_space<vmem>>) attributes {dimension_semantics = [#tpu.dimension_semantics<arbitrary>], iteration_bounds = array<i64: 2>, scalar_prefetch = 0 : i64, scratch_operands = 5 : i64, tpu.core_type = #tpu.core_type<tc>, window_params = [{transform_indices = @transform_0, window_bounds = array<i64: 8, 128>}, {transform_indices = @transform_1, window_bounds = array<i64: 8, 128>}, {pipeline_mode = #tpu.pipeline_mode<synchronous>, transform_indices = @transform_2, window_bounds = array<i64: 1, 128>}, {pipeline_mode = #tpu.pipeline_mode<synchronous>, transform_indices = @transform_3, window_bounds = array<i64: 1, 128>}, {pipeline_mode = #tpu.pipeline_mode<synchronous>, transform_indices = @transform_4, window_bounds = array<i64: 128, 130>}, {pipeline_mode = #tpu.pipeline_mode<synchronous>, transform_indices = @transform_5, window_bounds = array<i64: 128, 130>}, {pipeline_mode = #tpu.pipeline_mode<synchronous>, transform_indices = @transform_6, window_bounds = array<i64: 256, 130>}, {pipeline_mode = #tpu.pipeline_mode<synchronous>, transform_indices = @transform_7, window_bounds = array<i64: 1, 130>}, {pipeline_mode = #tpu.pipeline_mode<synchronous>, transform_indices = @transform_8, window_bounds = array<i64: 1, 128>}, {pipeline_mode = #tpu.pipeline_mode<synchronous>, transform_indices = @transform_9, window_bounds = array<i64: 1, 128>}, {pipeline_mode = #tpu.pipeline_mode<synchronous>, transform_indices = @transform_10, window_bounds = array<i64: 17, 128>}, {pipeline_mode = #tpu.pipeline_mode<synchronous>, transform_indices = @transform_11, window_bounds = array<i64: 1, 1>}, {transform_indices = @transform_12, window_bounds = array<i64: 8, 2>}]} {
    %c0_i32 = arith.constant 0 : i32
    %0 = arith.cmpi eq, %arg0, %c0_i32 : i32
    %1 = arith.extui %0 : i1 to i32
    %c0_i32_0 = arith.constant 0 : i32
    %2 = arith.cmpi ne, %1, %c0_i32_0 : i32
    scf.if %2 {
      %c0_94 = arith.constant 0 : index
      %c0_95 = arith.constant 0 : index
      %262 = vector.load %arg3[%c0_94, %c0_95] : memref<1x128xf32, #tpu.memory_space<vmem>>, vector<1x128xf32>
      %cst_96 = arith.constant 0.000000e+00 : f32
      %263 = vector.broadcast %cst_96 : f32 to vector<1x128xf32>
      %264 = vector.shape_cast %262 : vector<1x128xf32> to vector<1x1x128xf32>
      %cst_97 = arith.constant dense<0.000000e+00> : vector<1xf32>
      %265 = vector.multi_reduction <add>, %264, %cst_97 [1, 2] : vector<1x1x128xf32> to vector<1xf32>
      %266 = vector.shape_cast %265 : vector<1xf32> to vector<1x1x1xf32>
      %267 = vector.extract %266[0, 0, 0] : f32 from vector<1x1x1xf32>
      %cst_98 = arith.constant 0.000000e+00 : f32
      %268 = arith.cmpf one, %267, %cst_98 : f32
      %cst_99 = arith.constant 0.000000e+00 : f32
      %269 = vector.broadcast %cst_99 : f32 to vector<17x128xf32>
      %c0_100 = arith.constant 0 : index
      %c0_101 = arith.constant 0 : index
      %270 = vector.load %arg11[%c0_100, %c0_101] : memref<17x128xf32, #tpu.memory_space<vmem>>, vector<17x128xf32>
      tpu.vector_store %arg11[%c0_100, %c0_101], %269 {strides = array<i32>} : memref<17x128xf32, #tpu.memory_space<vmem>>, vector<17x128xf32>,
      %271 = arith.select %268, %262, %263 : vector<1x128xf32>
      %c0_102 = arith.constant 0 : index
      %c0_103 = arith.constant 0 : index
      %272 = vector.load %arg11[%c0_102, %c0_103] : memref<17x128xf32, #tpu.memory_space<vmem>>, vector<1x128xf32>
      tpu.vector_store %arg11[%c0_102, %c0_103], %271 {strides = array<i32>} : memref<17x128xf32, #tpu.memory_space<vmem>>, vector<1x128xf32>,
      %273 = arith.select %268, %262, %263 : vector<1x128xf32>
      %c0_104 = arith.constant 0 : index
      %c0_105 = arith.constant 0 : index
      %274 = vector.load %arg16[%c0_104, %c0_105] : memref<1x128xf32, #tpu.memory_space<vmem>>, vector<1x128xf32>
      tpu.vector_store %arg16[%c0_104, %c0_105], %273 {strides = array<i32>} : memref<1x128xf32, #tpu.memory_space<vmem>>, vector<1x128xf32>,
      %c0_106 = arith.constant 0 : index
      %c0_107 = arith.constant 0 : index
      %275 = vector.load %arg14[%c0_106, %c0_107] : memref<1x128xf32, #tpu.memory_space<vmem>>, vector<1x128xf32>
      tpu.vector_store %arg14[%c0_106, %c0_107], %263 {strides = array<i32>} : memref<1x128xf32, #tpu.memory_space<vmem>>, vector<1x128xf32>,
      %c0_108 = arith.constant 0 : index
      %c0_109 = arith.constant 0 : index
      %276 = vector.load %arg4[%c0_108, %c0_109] : memref<1x128xf32, #tpu.memory_space<vmem>>, vector<1x128xf32>
      %c0_110 = arith.constant 0 : index
      %c0_111 = arith.constant 0 : index
      %277 = vector.load %arg15[%c0_110, %c0_111] : memref<1x128xf32, #tpu.memory_space<vmem>>, vector<1x128xf32>
      tpu.vector_store %arg15[%c0_110, %c0_111], %276 {strides = array<i32>} : memref<1x128xf32, #tpu.memory_space<vmem>>, vector<1x128xf32>,
      %c1_i32_112 = arith.constant 1 : i32
      %c0_i32_113 = arith.constant 0 : i32
      %278 = arith.select %268, %c1_i32_112, %c0_i32_113 : i32
      %c0_114 = arith.constant 0 : index
      %279 = memref.load %arg17[%c0_114] : memref<1xi32, #tpu.memory_space<smem>>
      memref.store %278, %arg17[%c0_114] : memref<1xi32, #tpu.memory_space<smem>>
    } else {
    }
    %c0 = arith.constant 0 : index
    %c0_1 = arith.constant 0 : index
    %3 = vector.load %arg1[%c0, %c0_1] : memref<8x128xf32, #tpu.memory_space<vmem>>, vector<8x128xf32>
    %c0_2 = arith.constant 0 : index
    %c0_3 = arith.constant 0 : index
    %4 = vector.load %arg5[%c0_2, %c0_3] : memref<128x130xf32, #tpu.memory_space<vmem>>, vector<128x130xf32>
    %cst = arith.constant dense<0.000000e+00> : vector<8x130xf32>
    %5 = tpu.matmul %3, %4, %cst {dimension_numbers = #tpu.dot_dimension_numbers<[1], [0], [0], [1], [0, 0, 1, 1], [], []>} : vector<8x128xf32>, vector<128x130xf32>, vector<8x130xf32> -> vector<8x130xf32>
    %c0_4 = arith.constant 0 : index
    %c0_5 = arith.constant 0 : index
    %6 = vector.load %arg2[%c0_4, %c0_5] : memref<8x128xf32, #tpu.memory_space<vmem>>, vector<8x128xf32>
    %c0_6 = arith.constant 0 : index
    %c0_7 = arith.constant 0 : index
    %7 = vector.load %arg6[%c0_6, %c0_7] : memref<128x130xf32, #tpu.memory_space<vmem>>, vector<128x130xf32>
    %cst_8 = arith.constant dense<0.000000e+00> : vector<8x130xf32>
    %8 = tpu.matmul %6, %7, %cst_8 {dimension_numbers = #tpu.dot_dimension_numbers<[1], [0], [0], [1], [0, 0, 1, 1], [], []>} : vector<8x128xf32>, vector<128x130xf32>, vector<8x130xf32> -> vector<8x130xf32>
    %9 = arith.addf %5, %8 : vector<8x130xf32>
    %c0_9 = arith.constant 0 : index
    %c0_10 = arith.constant 0 : index
    %10 = vector.load %arg8[%c0_9, %c0_10] : memref<1x130xf32, #tpu.memory_space<vmem>>, vector<1x130xf32>
    %11 = vector.broadcast %10 : vector<1x130xf32> to vector<8x130xf32>
    %12 = arith.addf %9, %11 : vector<8x130xf32>
    %c0_11 = arith.constant 0 : index
    %c0_12 = arith.constant 0 : index
    %13 = vector.load %arg18[%c0_11, %c0_12] : memref<8x130xf32, #tpu.memory_space<vmem>>, vector<8x130xf32>
    tpu.vector_store %arg18[%c0_11, %c0_12], %12 {strides = array<i32>} : memref<8x130xf32, #tpu.memory_space<vmem>>, vector<8x130xf32>,
    %c0_13 = arith.constant 0 : index
    %c0_14 = arith.constant 0 : index
    %14 = vector.load %arg7[%c0_13, %c0_14] : memref<256x130xf32, #tpu.memory_space<vmem>>, vector<256x130xf32>
    %c0_15 = arith.constant 0 : index
    %c0_16 = arith.constant 0 : index
    %15 = vector.load %arg14[%c0_15, %c0_16] : memref<1x128xf32, #tpu.memory_space<vmem>>, vector<1x128xf32>
    %c0_17 = arith.constant 0 : index
    %c0_18 = arith.constant 0 : index
    %16 = vector.load %arg15[%c0_17, %c0_18] : memref<1x128xf32, #tpu.memory_space<vmem>>, vector<1x128xf32>
    %c0_19 = arith.constant 0 : index
    %c0_20 = arith.constant 0 : index
    %17 = vector.load %arg16[%c0_19, %c0_20] : memref<1x128xf32, #tpu.memory_space<vmem>>, vector<1x128xf32>
    %c0_21 = arith.constant 0 : index
    %18 = memref.load %arg17[%c0_21] : memref<1xi32, #tpu.memory_space<smem>>
    %c0_i32_22 = arith.constant 0 : i32
    %19 = arith.index_cast %c0_i32_22 : i32 to index
    %c0_23 = arith.constant 0 : index
    %20 = vector.load %arg18[%19, %c0_23] : memref<8x130xf32, #tpu.memory_space<vmem>>, vector<1x130xf32>
    %21 = tpu.concatenate %16, %15 in 1 : vector<1x128xf32>, vector<1x128xf32> -> vector<1x256xf32>
    %cst_24 = arith.constant dense<0.000000e+00> : vector<1x130xf32>
    %22 = tpu.matmul %21, %14, %cst_24 {dimension_numbers = #tpu.dot_dimension_numbers<[1], [0], [0], [1], [0, 0, 1, 1], [], []>} : vector<1x256xf32>, vector<256x130xf32>, vector<1x130xf32> -> vector<1x130xf32>
    %23 = arith.addf %20, %22 : vector<1x130xf32>
    %24 = vector.extract_strided_slice %23 {offsets = [0, 0], sizes = [1, 128], strides = [1, 1]} : vector<1x130xf32> to vector<1x128xf32>
    %25 = vector.extract_strided_slice %23 {offsets = [0, 128], sizes = [1, 2], strides = [1, 1]} : vector<1x130xf32> to vector<1x2xf32>
    %26 = math.tanh %24 : vector<1x128xf32>
    %27 = arith.index_cast %c0_i32_22 : i32 to index
    %c0_25 = arith.constant 0 : index
    %28 = vector.load %arg13[%27, %c0_25] : memref<8x2xf32, #tpu.memory_space<vmem>>, vector<1x2xf32>
    tpu.vector_store %arg13[%27, %c0_25], %25 {strides = array<i32>} : memref<8x2xf32, #tpu.memory_space<vmem>>, vector<1x2xf32>,
    %29 = vector.extract_strided_slice %25 {offsets = [0, 1], sizes = [1, 1], strides = [1, 1]} : vector<1x2xf32> to vector<1x1xf32>
    %30 = vector.extract %29[0, 0] : f32 from vector<1x1xf32>
    %31 = vector.extract_strided_slice %25 {offsets = [0, 0], sizes = [1, 1], strides = [1, 1]} : vector<1x2xf32> to vector<1x1xf32>
    %32 = vector.extract %31[0, 0] : f32 from vector<1x1xf32>
    %33 = arith.cmpf ogt, %30, %32 : f32
    %34 = arith.index_cast %c0_i32_22 : i32 to index
    %c0_26 = arith.constant 0 : index
    %35 = vector.load %arg1[%34, %c0_26] : memref<8x128xf32, #tpu.memory_space<vmem>>, vector<1x128xf32>
    %36 = arith.extui %33 : i1 to i32
    %c0_i32_27 = arith.constant 0 : i32
    %37 = arith.cmpi ne, %36, %c0_i32_27 : i32
    scf.if %37 {
      %262 = arith.index_cast %18 : i32 to index
      %c0_94 = arith.constant 0 : index
      %263 = vector.load %arg11[%262, %c0_94] : memref<17x128xf32, #tpu.memory_space<vmem>>, vector<1x128xf32>
      tpu.vector_store %arg11[%262, %c0_94], %35 {strides = array<i32>} : memref<17x128xf32, #tpu.memory_space<vmem>>, vector<1x128xf32>,
    } else {
    }
    %38 = arith.addf %17, %35 : vector<1x128xf32>
    %39 = arith.select %33, %38, %17 : vector<1x128xf32>
    %c1_i32 = arith.constant 1 : i32
    %40 = arith.addi %18, %c1_i32 : i32
    %41 = arith.select %33, %40, %18 : i32
    %c1_i32_28 = arith.constant 1 : i32
    %42 = arith.maxsi %41, %c1_i32_28 : i32
    %43 = arith.sitofp %42 : i32 to f32
    %44 = vector.broadcast %43 : f32 to vector<1x128xf32>
    %45 = arith.divf %39, %44 : vector<1x128xf32>
    %46 = arith.select %33, %45, %16 : vector<1x128xf32>
    %c1_i32_29 = arith.constant 1 : i32
    %47 = arith.index_cast %c1_i32_29 : i32 to index
    %c0_30 = arith.constant 0 : index
    %48 = vector.load %arg18[%47, %c0_30] : memref<8x130xf32, #tpu.memory_space<vmem>>, vector<1x130xf32>
    %49 = tpu.concatenate %46, %26 in 1 : vector<1x128xf32>, vector<1x128xf32> -> vector<1x256xf32>
    %cst_31 = arith.constant dense<0.000000e+00> : vector<1x130xf32>
    %50 = tpu.matmul %49, %14, %cst_31 {dimension_numbers = #tpu.dot_dimension_numbers<[1], [0], [0], [1], [0, 0, 1, 1], [], []>} : vector<1x256xf32>, vector<256x130xf32>, vector<1x130xf32> -> vector<1x130xf32>
    %51 = arith.addf %48, %50 : vector<1x130xf32>
    %52 = vector.extract_strided_slice %51 {offsets = [0, 0], sizes = [1, 128], strides = [1, 1]} : vector<1x130xf32> to vector<1x128xf32>
    %53 = vector.extract_strided_slice %51 {offsets = [0, 128], sizes = [1, 2], strides = [1, 1]} : vector<1x130xf32> to vector<1x2xf32>
    %54 = math.tanh %52 : vector<1x128xf32>
    %55 = arith.index_cast %c1_i32_29 : i32 to index
    %c0_32 = arith.constant 0 : index
    %56 = vector.load %arg13[%55, %c0_32] : memref<8x2xf32, #tpu.memory_space<vmem>>, vector<1x2xf32>
    tpu.vector_store %arg13[%55, %c0_32], %53 {strides = array<i32>} : memref<8x2xf32, #tpu.memory_space<vmem>>, vector<1x2xf32>,
    %57 = vector.extract_strided_slice %53 {offsets = [0, 1], sizes = [1, 1], strides = [1, 1]} : vector<1x2xf32> to vector<1x1xf32>
    %58 = vector.extract %57[0, 0] : f32 from vector<1x1xf32>
    %59 = vector.extract_strided_slice %53 {offsets = [0, 0], sizes = [1, 1], strides = [1, 1]} : vector<1x2xf32> to vector<1x1xf32>
    %60 = vector.extract %59[0, 0] : f32 from vector<1x1xf32>
    %61 = arith.cmpf ogt, %58, %60 : f32
    %62 = arith.index_cast %c1_i32_29 : i32 to index
    %c0_33 = arith.constant 0 : index
    %63 = vector.load %arg1[%62, %c0_33] : memref<8x128xf32, #tpu.memory_space<vmem>>, vector<1x128xf32>
    %64 = arith.extui %61 : i1 to i32
    %c0_i32_34 = arith.constant 0 : i32
    %65 = arith.cmpi ne, %64, %c0_i32_34 : i32
    scf.if %65 {
      %262 = arith.index_cast %41 : i32 to index
      %c0_94 = arith.constant 0 : index
      %263 = vector.load %arg11[%262, %c0_94] : memref<17x128xf32, #tpu.memory_space<vmem>>, vector<1x128xf32>
      tpu.vector_store %arg11[%262, %c0_94], %63 {strides = array<i32>} : memref<17x128xf32, #tpu.memory_space<vmem>>, vector<1x128xf32>,
    } else {
    }
    %66 = arith.addf %39, %63 : vector<1x128xf32>
    %67 = arith.select %61, %66, %39 : vector<1x128xf32>
    %c1_i32_35 = arith.constant 1 : i32
    %68 = arith.addi %41, %c1_i32_35 : i32
    %69 = arith.select %61, %68, %41 : i32
    %c1_i32_36 = arith.constant 1 : i32
    %70 = arith.maxsi %69, %c1_i32_36 : i32
    %71 = arith.sitofp %70 : i32 to f32
    %72 = vector.broadcast %71 : f32 to vector<1x128xf32>
    %73 = arith.divf %67, %72 : vector<1x128xf32>
    %74 = arith.select %61, %73, %46 : vector<1x128xf32>
    %c2_i32 = arith.constant 2 : i32
    %75 = arith.index_cast %c2_i32 : i32 to index
    %c0_37 = arith.constant 0 : index
    %76 = vector.load %arg18[%75, %c0_37] : memref<8x130xf32, #tpu.memory_space<vmem>>, vector<1x130xf32>
    %77 = tpu.concatenate %74, %54 in 1 : vector<1x128xf32>, vector<1x128xf32> -> vector<1x256xf32>
    %cst_38 = arith.constant dense<0.000000e+00> : vector<1x130xf32>
    %78 = tpu.matmul %77, %14, %cst_38 {dimension_numbers = #tpu.dot_dimension_numbers<[1], [0], [0], [1], [0, 0, 1, 1], [], []>} : vector<1x256xf32>, vector<256x130xf32>, vector<1x130xf32> -> vector<1x130xf32>
    %79 = arith.addf %76, %78 : vector<1x130xf32>
    %80 = vector.extract_strided_slice %79 {offsets = [0, 0], sizes = [1, 128], strides = [1, 1]} : vector<1x130xf32> to vector<1x128xf32>
    %81 = vector.extract_strided_slice %79 {offsets = [0, 128], sizes = [1, 2], strides = [1, 1]} : vector<1x130xf32> to vector<1x2xf32>
    %82 = math.tanh %80 : vector<1x128xf32>
    %83 = arith.index_cast %c2_i32 : i32 to index
    %c0_39 = arith.constant 0 : index
    %84 = vector.load %arg13[%83, %c0_39] : memref<8x2xf32, #tpu.memory_space<vmem>>, vector<1x2xf32>
    tpu.vector_store %arg13[%83, %c0_39], %81 {strides = array<i32>} : memref<8x2xf32, #tpu.memory_space<vmem>>, vector<1x2xf32>,
    %85 = vector.extract_strided_slice %81 {offsets = [0, 1], sizes = [1, 1], strides = [1, 1]} : vector<1x2xf32> to vector<1x1xf32>
    %86 = vector.extract %85[0, 0] : f32 from vector<1x1xf32>
    %87 = vector.extract_strided_slice %81 {offsets = [0, 0], sizes = [1, 1], strides = [1, 1]} : vector<1x2xf32> to vector<1x1xf32>
    %88 = vector.extract %87[0, 0] : f32 from vector<1x1xf32>
    %89 = arith.cmpf ogt, %86, %88 : f32
    %90 = arith.index_cast %c2_i32 : i32 to index
    %c0_40 = arith.constant 0 : index
    %91 = vector.load %arg1[%90, %c0_40] : memref<8x128xf32, #tpu.memory_space<vmem>>, vector<1x128xf32>
    %92 = arith.extui %89 : i1 to i32
    %c0_i32_41 = arith.constant 0 : i32
    %93 = arith.cmpi ne, %92, %c0_i32_41 : i32
    scf.if %93 {
      %262 = arith.index_cast %69 : i32 to index
      %c0_94 = arith.constant 0 : index
      %263 = vector.load %arg11[%262, %c0_94] : memref<17x128xf32, #tpu.memory_space<vmem>>, vector<1x128xf32>
      tpu.vector_store %arg11[%262, %c0_94], %91 {strides = array<i32>} : memref<17x128xf32, #tpu.memory_space<vmem>>, vector<1x128xf32>,
    } else {
    }
    %94 = arith.addf %67, %91 : vector<1x128xf32>
    %95 = arith.select %89, %94, %67 : vector<1x128xf32>
    %c1_i32_42 = arith.constant 1 : i32
    %96 = arith.addi %69, %c1_i32_42 : i32
    %97 = arith.select %89, %96, %69 : i32
    %c1_i32_43 = arith.constant 1 : i32
    %98 = arith.maxsi %97, %c1_i32_43 : i32
    %99 = arith.sitofp %98 : i32 to f32
    %100 = vector.broadcast %99 : f32 to vector<1x128xf32>
    %101 = arith.divf %95, %100 : vector<1x128xf32>
    %102 = arith.select %89, %101, %74 : vector<1x128xf32>
    %c3_i32 = arith.constant 3 : i32
    %103 = arith.index_cast %c3_i32 : i32 to index
    %c0_44 = arith.constant 0 : index
    %104 = vector.load %arg18[%103, %c0_44] : memref<8x130xf32, #tpu.memory_space<vmem>>, vector<1x130xf32>
    %105 = tpu.concatenate %102, %82 in 1 : vector<1x128xf32>, vector<1x128xf32> -> vector<1x256xf32>
    %cst_45 = arith.constant dense<0.000000e+00> : vector<1x130xf32>
    %106 = tpu.matmul %105, %14, %cst_45 {dimension_numbers = #tpu.dot_dimension_numbers<[1], [0], [0], [1], [0, 0, 1, 1], [], []>} : vector<1x256xf32>, vector<256x130xf32>, vector<1x130xf32> -> vector<1x130xf32>
    %107 = arith.addf %104, %106 : vector<1x130xf32>
    %108 = vector.extract_strided_slice %107 {offsets = [0, 0], sizes = [1, 128], strides = [1, 1]} : vector<1x130xf32> to vector<1x128xf32>
    %109 = vector.extract_strided_slice %107 {offsets = [0, 128], sizes = [1, 2], strides = [1, 1]} : vector<1x130xf32> to vector<1x2xf32>
    %110 = math.tanh %108 : vector<1x128xf32>
    %111 = arith.index_cast %c3_i32 : i32 to index
    %c0_46 = arith.constant 0 : index
    %112 = vector.load %arg13[%111, %c0_46] : memref<8x2xf32, #tpu.memory_space<vmem>>, vector<1x2xf32>
    tpu.vector_store %arg13[%111, %c0_46], %109 {strides = array<i32>} : memref<8x2xf32, #tpu.memory_space<vmem>>, vector<1x2xf32>,
    %113 = vector.extract_strided_slice %109 {offsets = [0, 1], sizes = [1, 1], strides = [1, 1]} : vector<1x2xf32> to vector<1x1xf32>
    %114 = vector.extract %113[0, 0] : f32 from vector<1x1xf32>
    %115 = vector.extract_strided_slice %109 {offsets = [0, 0], sizes = [1, 1], strides = [1, 1]} : vector<1x2xf32> to vector<1x1xf32>
    %116 = vector.extract %115[0, 0] : f32 from vector<1x1xf32>
    %117 = arith.cmpf ogt, %114, %116 : f32
    %118 = arith.index_cast %c3_i32 : i32 to index
    %c0_47 = arith.constant 0 : index
    %119 = vector.load %arg1[%118, %c0_47] : memref<8x128xf32, #tpu.memory_space<vmem>>, vector<1x128xf32>
    %120 = arith.extui %117 : i1 to i32
    %c0_i32_48 = arith.constant 0 : i32
    %121 = arith.cmpi ne, %120, %c0_i32_48 : i32
    scf.if %121 {
      %262 = arith.index_cast %97 : i32 to index
      %c0_94 = arith.constant 0 : index
      %263 = vector.load %arg11[%262, %c0_94] : memref<17x128xf32, #tpu.memory_space<vmem>>, vector<1x128xf32>
      tpu.vector_store %arg11[%262, %c0_94], %119 {strides = array<i32>} : memref<17x128xf32, #tpu.memory_space<vmem>>, vector<1x128xf32>,
    } else {
    }
    %122 = arith.addf %95, %119 : vector<1x128xf32>
    %123 = arith.select %117, %122, %95 : vector<1x128xf32>
    %c1_i32_49 = arith.constant 1 : i32
    %124 = arith.addi %97, %c1_i32_49 : i32
    %125 = arith.select %117, %124, %97 : i32
    %c1_i32_50 = arith.constant 1 : i32
    %126 = arith.maxsi %125, %c1_i32_50 : i32
    %127 = arith.sitofp %126 : i32 to f32
    %128 = vector.broadcast %127 : f32 to vector<1x128xf32>
    %129 = arith.divf %123, %128 : vector<1x128xf32>
    %130 = arith.select %117, %129, %102 : vector<1x128xf32>
    %c4_i32 = arith.constant 4 : i32
    %131 = arith.index_cast %c4_i32 : i32 to index
    %c0_51 = arith.constant 0 : index
    %132 = vector.load %arg18[%131, %c0_51] : memref<8x130xf32, #tpu.memory_space<vmem>>, vector<1x130xf32>
    %133 = tpu.concatenate %130, %110 in 1 : vector<1x128xf32>, vector<1x128xf32> -> vector<1x256xf32>
    %cst_52 = arith.constant dense<0.000000e+00> : vector<1x130xf32>
    %134 = tpu.matmul %133, %14, %cst_52 {dimension_numbers = #tpu.dot_dimension_numbers<[1], [0], [0], [1], [0, 0, 1, 1], [], []>} : vector<1x256xf32>, vector<256x130xf32>, vector<1x130xf32> -> vector<1x130xf32>
    %135 = arith.addf %132, %134 : vector<1x130xf32>
    %136 = vector.extract_strided_slice %135 {offsets = [0, 0], sizes = [1, 128], strides = [1, 1]} : vector<1x130xf32> to vector<1x128xf32>
    %137 = vector.extract_strided_slice %135 {offsets = [0, 128], sizes = [1, 2], strides = [1, 1]} : vector<1x130xf32> to vector<1x2xf32>
    %138 = math.tanh %136 : vector<1x128xf32>
    %139 = arith.index_cast %c4_i32 : i32 to index
    %c0_53 = arith.constant 0 : index
    %140 = vector.load %arg13[%139, %c0_53] : memref<8x2xf32, #tpu.memory_space<vmem>>, vector<1x2xf32>
    tpu.vector_store %arg13[%139, %c0_53], %137 {strides = array<i32>} : memref<8x2xf32, #tpu.memory_space<vmem>>, vector<1x2xf32>,
    %141 = vector.extract_strided_slice %137 {offsets = [0, 1], sizes = [1, 1], strides = [1, 1]} : vector<1x2xf32> to vector<1x1xf32>
    %142 = vector.extract %141[0, 0] : f32 from vector<1x1xf32>
    %143 = vector.extract_strided_slice %137 {offsets = [0, 0], sizes = [1, 1], strides = [1, 1]} : vector<1x2xf32> to vector<1x1xf32>
    %144 = vector.extract %143[0, 0] : f32 from vector<1x1xf32>
    %145 = arith.cmpf ogt, %142, %144 : f32
    %146 = arith.index_cast %c4_i32 : i32 to index
    %c0_54 = arith.constant 0 : index
    %147 = vector.load %arg1[%146, %c0_54] : memref<8x128xf32, #tpu.memory_space<vmem>>, vector<1x128xf32>
    %148 = arith.extui %145 : i1 to i32
    %c0_i32_55 = arith.constant 0 : i32
    %149 = arith.cmpi ne, %148, %c0_i32_55 : i32
    scf.if %149 {
      %262 = arith.index_cast %125 : i32 to index
      %c0_94 = arith.constant 0 : index
      %263 = vector.load %arg11[%262, %c0_94] : memref<17x128xf32, #tpu.memory_space<vmem>>, vector<1x128xf32>
      tpu.vector_store %arg11[%262, %c0_94], %147 {strides = array<i32>} : memref<17x128xf32, #tpu.memory_space<vmem>>, vector<1x128xf32>,
    } else {
    }
    %150 = arith.addf %123, %147 : vector<1x128xf32>
    %151 = arith.select %145, %150, %123 : vector<1x128xf32>
    %c1_i32_56 = arith.constant 1 : i32
    %152 = arith.addi %125, %c1_i32_56 : i32
    %153 = arith.select %145, %152, %125 : i32
    %c1_i32_57 = arith.constant 1 : i32
    %154 = arith.maxsi %153, %c1_i32_57 : i32
    %155 = arith.sitofp %154 : i32 to f32
    %156 = vector.broadcast %155 : f32 to vector<1x128xf32>
    %157 = arith.divf %151, %156 : vector<1x128xf32>
    %158 = arith.select %145, %157, %130 : vector<1x128xf32>
    %c5_i32 = arith.constant 5 : i32
    %159 = arith.index_cast %c5_i32 : i32 to index
    %c0_58 = arith.constant 0 : index
    %160 = vector.load %arg18[%159, %c0_58] : memref<8x130xf32, #tpu.memory_space<vmem>>, vector<1x130xf32>
    %161 = tpu.concatenate %158, %138 in 1 : vector<1x128xf32>, vector<1x128xf32> -> vector<1x256xf32>
    %cst_59 = arith.constant dense<0.000000e+00> : vector<1x130xf32>
    %162 = tpu.matmul %161, %14, %cst_59 {dimension_numbers = #tpu.dot_dimension_numbers<[1], [0], [0], [1], [0, 0, 1, 1], [], []>} : vector<1x256xf32>, vector<256x130xf32>, vector<1x130xf32> -> vector<1x130xf32>
    %163 = arith.addf %160, %162 : vector<1x130xf32>
    %164 = vector.extract_strided_slice %163 {offsets = [0, 0], sizes = [1, 128], strides = [1, 1]} : vector<1x130xf32> to vector<1x128xf32>
    %165 = vector.extract_strided_slice %163 {offsets = [0, 128], sizes = [1, 2], strides = [1, 1]} : vector<1x130xf32> to vector<1x2xf32>
    %166 = math.tanh %164 : vector<1x128xf32>
    %167 = arith.index_cast %c5_i32 : i32 to index
    %c0_60 = arith.constant 0 : index
    %168 = vector.load %arg13[%167, %c0_60] : memref<8x2xf32, #tpu.memory_space<vmem>>, vector<1x2xf32>
    tpu.vector_store %arg13[%167, %c0_60], %165 {strides = array<i32>} : memref<8x2xf32, #tpu.memory_space<vmem>>, vector<1x2xf32>,
    %169 = vector.extract_strided_slice %165 {offsets = [0, 1], sizes = [1, 1], strides = [1, 1]} : vector<1x2xf32> to vector<1x1xf32>
    %170 = vector.extract %169[0, 0] : f32 from vector<1x1xf32>
    %171 = vector.extract_strided_slice %165 {offsets = [0, 0], sizes = [1, 1], strides = [1, 1]} : vector<1x2xf32> to vector<1x1xf32>
    %172 = vector.extract %171[0, 0] : f32 from vector<1x1xf32>
    %173 = arith.cmpf ogt, %170, %172 : f32
    %174 = arith.index_cast %c5_i32 : i32 to index
    %c0_61 = arith.constant 0 : index
    %175 = vector.load %arg1[%174, %c0_61] : memref<8x128xf32, #tpu.memory_space<vmem>>, vector<1x128xf32>
    %176 = arith.extui %173 : i1 to i32
    %c0_i32_62 = arith.constant 0 : i32
    %177 = arith.cmpi ne, %176, %c0_i32_62 : i32
    scf.if %177 {
      %262 = arith.index_cast %153 : i32 to index
      %c0_94 = arith.constant 0 : index
      %263 = vector.load %arg11[%262, %c0_94] : memref<17x128xf32, #tpu.memory_space<vmem>>, vector<1x128xf32>
      tpu.vector_store %arg11[%262, %c0_94], %175 {strides = array<i32>} : memref<17x128xf32, #tpu.memory_space<vmem>>, vector<1x128xf32>,
    } else {
    }
    %178 = arith.addf %151, %175 : vector<1x128xf32>
    %179 = arith.select %173, %178, %151 : vector<1x128xf32>
    %c1_i32_63 = arith.constant 1 : i32
    %180 = arith.addi %153, %c1_i32_63 : i32
    %181 = arith.select %173, %180, %153 : i32
    %c1_i32_64 = arith.constant 1 : i32
    %182 = arith.maxsi %181, %c1_i32_64 : i32
    %183 = arith.sitofp %182 : i32 to f32
    %184 = vector.broadcast %183 : f32 to vector<1x128xf32>
    %185 = arith.divf %179, %184 : vector<1x128xf32>
    %186 = arith.select %173, %185, %158 : vector<1x128xf32>
    %c6_i32 = arith.constant 6 : i32
    %187 = arith.index_cast %c6_i32 : i32 to index
    %c0_65 = arith.constant 0 : index
    %188 = vector.load %arg18[%187, %c0_65] : memref<8x130xf32, #tpu.memory_space<vmem>>, vector<1x130xf32>
    %189 = tpu.concatenate %186, %166 in 1 : vector<1x128xf32>, vector<1x128xf32> -> vector<1x256xf32>
    %cst_66 = arith.constant dense<0.000000e+00> : vector<1x130xf32>
    %190 = tpu.matmul %189, %14, %cst_66 {dimension_numbers = #tpu.dot_dimension_numbers<[1], [0], [0], [1], [0, 0, 1, 1], [], []>} : vector<1x256xf32>, vector<256x130xf32>, vector<1x130xf32> -> vector<1x130xf32>
    %191 = arith.addf %188, %190 : vector<1x130xf32>
    %192 = vector.extract_strided_slice %191 {offsets = [0, 0], sizes = [1, 128], strides = [1, 1]} : vector<1x130xf32> to vector<1x128xf32>
    %193 = vector.extract_strided_slice %191 {offsets = [0, 128], sizes = [1, 2], strides = [1, 1]} : vector<1x130xf32> to vector<1x2xf32>
    %194 = math.tanh %192 : vector<1x128xf32>
    %195 = arith.index_cast %c6_i32 : i32 to index
    %c0_67 = arith.constant 0 : index
    %196 = vector.load %arg13[%195, %c0_67] : memref<8x2xf32, #tpu.memory_space<vmem>>, vector<1x2xf32>
    tpu.vector_store %arg13[%195, %c0_67], %193 {strides = array<i32>} : memref<8x2xf32, #tpu.memory_space<vmem>>, vector<1x2xf32>,
    %197 = vector.extract_strided_slice %193 {offsets = [0, 1], sizes = [1, 1], strides = [1, 1]} : vector<1x2xf32> to vector<1x1xf32>
    %198 = vector.extract %197[0, 0] : f32 from vector<1x1xf32>
    %199 = vector.extract_strided_slice %193 {offsets = [0, 0], sizes = [1, 1], strides = [1, 1]} : vector<1x2xf32> to vector<1x1xf32>
    %200 = vector.extract %199[0, 0] : f32 from vector<1x1xf32>
    %201 = arith.cmpf ogt, %198, %200 : f32
    %202 = arith.index_cast %c6_i32 : i32 to index
    %c0_68 = arith.constant 0 : index
    %203 = vector.load %arg1[%202, %c0_68] : memref<8x128xf32, #tpu.memory_space<vmem>>, vector<1x128xf32>
    %204 = arith.extui %201 : i1 to i32
    %c0_i32_69 = arith.constant 0 : i32
    %205 = arith.cmpi ne, %204, %c0_i32_69 : i32
    scf.if %205 {
      %262 = arith.index_cast %181 : i32 to index
      %c0_94 = arith.constant 0 : index
      %263 = vector.load %arg11[%262, %c0_94] : memref<17x128xf32, #tpu.memory_space<vmem>>, vector<1x128xf32>
      tpu.vector_store %arg11[%262, %c0_94], %203 {strides = array<i32>} : memref<17x128xf32, #tpu.memory_space<vmem>>, vector<1x128xf32>,
    } else {
    }
    %206 = arith.addf %179, %203 : vector<1x128xf32>
    %207 = arith.select %201, %206, %179 : vector<1x128xf32>
    %c1_i32_70 = arith.constant 1 : i32
    %208 = arith.addi %181, %c1_i32_70 : i32
    %209 = arith.select %201, %208, %181 : i32
    %c1_i32_71 = arith.constant 1 : i32
    %210 = arith.maxsi %209, %c1_i32_71 : i32
    %211 = arith.sitofp %210 : i32 to f32
    %212 = vector.broadcast %211 : f32 to vector<1x128xf32>
    %213 = arith.divf %207, %212 : vector<1x128xf32>
    %214 = arith.select %201, %213, %186 : vector<1x128xf32>
    %c7_i32 = arith.constant 7 : i32
    %215 = arith.index_cast %c7_i32 : i32 to index
    %c0_72 = arith.constant 0 : index
    %216 = vector.load %arg18[%215, %c0_72] : memref<8x130xf32, #tpu.memory_space<vmem>>, vector<1x130xf32>
    %217 = tpu.concatenate %214, %194 in 1 : vector<1x128xf32>, vector<1x128xf32> -> vector<1x256xf32>
    %cst_73 = arith.constant dense<0.000000e+00> : vector<1x130xf32>
    %218 = tpu.matmul %217, %14, %cst_73 {dimension_numbers = #tpu.dot_dimension_numbers<[1], [0], [0], [1], [0, 0, 1, 1], [], []>} : vector<1x256xf32>, vector<256x130xf32>, vector<1x130xf32> -> vector<1x130xf32>
    %219 = arith.addf %216, %218 : vector<1x130xf32>
    %220 = vector.extract_strided_slice %219 {offsets = [0, 0], sizes = [1, 128], strides = [1, 1]} : vector<1x130xf32> to vector<1x128xf32>
    %221 = vector.extract_strided_slice %219 {offsets = [0, 128], sizes = [1, 2], strides = [1, 1]} : vector<1x130xf32> to vector<1x2xf32>
    %222 = math.tanh %220 : vector<1x128xf32>
    %223 = arith.index_cast %c7_i32 : i32 to index
    %c0_74 = arith.constant 0 : index
    %224 = vector.load %arg13[%223, %c0_74] : memref<8x2xf32, #tpu.memory_space<vmem>>, vector<1x2xf32>
    tpu.vector_store %arg13[%223, %c0_74], %221 {strides = array<i32>} : memref<8x2xf32, #tpu.memory_space<vmem>>, vector<1x2xf32>,
    %225 = vector.extract_strided_slice %221 {offsets = [0, 1], sizes = [1, 1], strides = [1, 1]} : vector<1x2xf32> to vector<1x1xf32>
    %226 = vector.extract %225[0, 0] : f32 from vector<1x1xf32>
    %227 = vector.extract_strided_slice %221 {offsets = [0, 0], sizes = [1, 1], strides = [1, 1]} : vector<1x2xf32> to vector<1x1xf32>
    %228 = vector.extract %227[0, 0] : f32 from vector<1x1xf32>
    %229 = arith.cmpf ogt, %226, %228 : f32
    %230 = arith.index_cast %c7_i32 : i32 to index
    %c0_75 = arith.constant 0 : index
    %231 = vector.load %arg1[%230, %c0_75] : memref<8x128xf32, #tpu.memory_space<vmem>>, vector<1x128xf32>
    %232 = arith.extui %229 : i1 to i32
    %c0_i32_76 = arith.constant 0 : i32
    %233 = arith.cmpi ne, %232, %c0_i32_76 : i32
    scf.if %233 {
      %262 = arith.index_cast %209 : i32 to index
      %c0_94 = arith.constant 0 : index
      %263 = vector.load %arg11[%262, %c0_94] : memref<17x128xf32, #tpu.memory_space<vmem>>, vector<1x128xf32>
      tpu.vector_store %arg11[%262, %c0_94], %231 {strides = array<i32>} : memref<17x128xf32, #tpu.memory_space<vmem>>, vector<1x128xf32>,
    } else {
    }
    %234 = arith.addf %207, %231 : vector<1x128xf32>
    %235 = arith.select %229, %234, %207 : vector<1x128xf32>
    %c1_i32_77 = arith.constant 1 : i32
    %236 = arith.addi %209, %c1_i32_77 : i32
    %237 = arith.select %229, %236, %209 : i32
    %c1_i32_78 = arith.constant 1 : i32
    %238 = arith.maxsi %237, %c1_i32_78 : i32
    %239 = arith.sitofp %238 : i32 to f32
    %240 = vector.broadcast %239 : f32 to vector<1x128xf32>
    %241 = arith.divf %235, %240 : vector<1x128xf32>
    %242 = arith.select %229, %241, %214 : vector<1x128xf32>
    %c8_i32 = arith.constant 8 : i32
    %c0_79 = arith.constant 0 : index
    %c0_80 = arith.constant 0 : index
    %243 = vector.load %arg14[%c0_79, %c0_80] : memref<1x128xf32, #tpu.memory_space<vmem>>, vector<1x128xf32>
    tpu.vector_store %arg14[%c0_79, %c0_80], %222 {strides = array<i32>} : memref<1x128xf32, #tpu.memory_space<vmem>>, vector<1x128xf32>,
    %c0_81 = arith.constant 0 : index
    %c0_82 = arith.constant 0 : index
    %244 = vector.load %arg15[%c0_81, %c0_82] : memref<1x128xf32, #tpu.memory_space<vmem>>, vector<1x128xf32>
    tpu.vector_store %arg15[%c0_81, %c0_82], %242 {strides = array<i32>} : memref<1x128xf32, #tpu.memory_space<vmem>>, vector<1x128xf32>,
    %c0_83 = arith.constant 0 : index
    %c0_84 = arith.constant 0 : index
    %245 = vector.load %arg16[%c0_83, %c0_84] : memref<1x128xf32, #tpu.memory_space<vmem>>, vector<1x128xf32>
    tpu.vector_store %arg16[%c0_83, %c0_84], %235 {strides = array<i32>} : memref<1x128xf32, #tpu.memory_space<vmem>>, vector<1x128xf32>,
    %c0_85 = arith.constant 0 : index
    %246 = memref.load %arg17[%c0_85] : memref<1xi32, #tpu.memory_space<smem>>
    memref.store %237, %arg17[%c0_85] : memref<1xi32, #tpu.memory_space<smem>>
    %c0_86 = arith.constant 0 : index
    %c0_87 = arith.constant 0 : index
    %247 = vector.load %arg13[%c0_86, %c0_87] : memref<8x2xf32, #tpu.memory_space<vmem>>, vector<8x2xf32>
    %cst_88 = arith.constant dense<0xFF800000> : vector<8xf32>
    %248 = vector.multi_reduction <maximumf>, %247, %cst_88 [1] : vector<8x2xf32> to vector<8xf32>
    %249 = vector.shape_cast %248 : vector<8xf32> to vector<8x1xf32>
    %250 = vector.broadcast %249 : vector<8x1xf32> to vector<8x2xf32>
    %251 = arith.subf %247, %250 : vector<8x2xf32>
    %252 = math.exp %251 : vector<8x2xf32>
    %cst_89 = arith.constant dense<0.000000e+00> : vector<8xf32>
    %253 = vector.multi_reduction <add>, %252, %cst_89 [1] : vector<8x2xf32> to vector<8xf32>
    %254 = vector.shape_cast %253 : vector<8xf32> to vector<8x1xf32>
    %255 = tpu.reciprocal %254 {approx = true} : vector<8x1xf32> -> vector<8x1xf32>
    %256 = vector.broadcast %255 : vector<8x1xf32> to vector<8x2xf32>
    %257 = arith.mulf %252, %256 : vector<8x2xf32>
    %c0_90 = arith.constant 0 : index
    %c0_91 = arith.constant 0 : index
    %258 = vector.load %arg13[%c0_90, %c0_91] : memref<8x2xf32, #tpu.memory_space<vmem>>, vector<8x2xf32>
    tpu.vector_store %arg13[%c0_90, %c0_91], %257 {strides = array<i32>} : memref<8x2xf32, #tpu.memory_space<vmem>>, vector<8x2xf32>,
    %c1_i32_92 = arith.constant 1 : i32
    %259 = arith.cmpi eq, %arg0, %c1_i32_92 : i32
    %260 = arith.extui %259 : i1 to i32
    %c0_i32_93 = arith.constant 0 : i32
    %261 = arith.cmpi ne, %260, %c0_i32_93 : i32
    scf.if %261 {
      %c0_94 = arith.constant 0 : index
      %c0_95 = arith.constant 0 : index
      %262 = vector.load %arg9[%c0_94, %c0_95] : memref<1x128xf32, #tpu.memory_space<vmem>>, vector<1x128xf32>
      tpu.vector_store %arg9[%c0_94, %c0_95], %222 {strides = array<i32>} : memref<1x128xf32, #tpu.memory_space<vmem>>, vector<1x128xf32>,
      %c0_96 = arith.constant 0 : index
      %c0_97 = arith.constant 0 : index
      %263 = vector.load %arg10[%c0_96, %c0_97] : memref<1x128xf32, #tpu.memory_space<vmem>>, vector<1x128xf32>
      tpu.vector_store %arg10[%c0_96, %c0_97], %242 {strides = array<i32>} : memref<1x128xf32, #tpu.memory_space<vmem>>, vector<1x128xf32>,
      %264 = vector.broadcast %237 : i32 to vector<1x1xi32>
      %c0_98 = arith.constant 0 : index
      %c0_99 = arith.constant 0 : index
      %265 = vector.load %arg12[%c0_98, %c0_99] : memref<1x1xi32, #tpu.memory_space<vmem>>, vector<1x1xi32>
      tpu.vector_store %arg12[%c0_98, %c0_99], %264 {strides = array<i32>} : memref<1x1xi32, #tpu.memory_space<vmem>>, vector<1x1xi32>,
    } else {
    }
    return
  }
  func.func @transform_0(%arg0: i32) -> (i32, i32) {
    %c0_i32 = arith.constant 0 : i32
    %c0_i32_0 = arith.constant 0 : i32
    return %arg0, %c0_i32 : i32, i32
  }
  func.func @transform_1(%arg0: i32) -> (i32, i32) {
    %c0_i32 = arith.constant 0 : i32
    %c0_i32_0 = arith.constant 0 : i32
    return %arg0, %c0_i32 : i32, i32
  }
  func.func @transform_2(%arg0: i32) -> (i32, i32) {
    %c0_i32 = arith.constant 0 : i32
    %c0_i32_0 = arith.constant 0 : i32
    %c0_i32_1 = arith.constant 0 : i32
    return %c0_i32, %c0_i32_0 : i32, i32
  }
  func.func @transform_3(%arg0: i32) -> (i32, i32) {
    %c0_i32 = arith.constant 0 : i32
    %c0_i32_0 = arith.constant 0 : i32
    %c0_i32_1 = arith.constant 0 : i32
    return %c0_i32, %c0_i32_0 : i32, i32
  }
  func.func @transform_4(%arg0: i32) -> (i32, i32) {
    %c0_i32 = arith.constant 0 : i32
    %c0_i32_0 = arith.constant 0 : i32
    %c0_i32_1 = arith.constant 0 : i32
    return %c0_i32, %c0_i32_0 : i32, i32
  }
  func.func @transform_5(%arg0: i32) -> (i32, i32) {
    %c0_i32 = arith.constant 0 : i32
    %c0_i32_0 = arith.constant 0 : i32
    %c0_i32_1 = arith.constant 0 : i32
    return %c0_i32, %c0_i32_0 : i32, i32
  }
  func.func @transform_6(%arg0: i32) -> (i32, i32) {
    %c0_i32 = arith.constant 0 : i32
    %c0_i32_0 = arith.constant 0 : i32
    %c0_i32_1 = arith.constant 0 : i32
    return %c0_i32, %c0_i32_0 : i32, i32
  }
  func.func @transform_7(%arg0: i32) -> (i32, i32) {
    %c0_i32 = arith.constant 0 : i32
    %c0_i32_0 = arith.constant 0 : i32
    %c0_i32_1 = arith.constant 0 : i32
    return %c0_i32, %c0_i32_0 : i32, i32
  }
  func.func @transform_8(%arg0: i32) -> (i32, i32) {
    %c0_i32 = arith.constant 0 : i32
    %c0_i32_0 = arith.constant 0 : i32
    %c0_i32_1 = arith.constant 0 : i32
    return %c0_i32, %c0_i32_0 : i32, i32
  }
  func.func @transform_9(%arg0: i32) -> (i32, i32) {
    %c0_i32 = arith.constant 0 : i32
    %c0_i32_0 = arith.constant 0 : i32
    %c0_i32_1 = arith.constant 0 : i32
    return %c0_i32, %c0_i32_0 : i32, i32
  }
  func.func @transform_10(%arg0: i32) -> (i32, i32) {
    %c0_i32 = arith.constant 0 : i32
    %c0_i32_0 = arith.constant 0 : i32
    %c0_i32_1 = arith.constant 0 : i32
    return %c0_i32, %c0_i32_0 : i32, i32
  }
  func.func @transform_11(%arg0: i32) -> (i32, i32) {
    %c0_i32 = arith.constant 0 : i32
    %c0_i32_0 = arith.constant 0 : i32
    %c0_i32_1 = arith.constant 0 : i32
    return %c0_i32, %c0_i32_0 : i32, i32
  }
  func.func @transform_12(%arg0: i32) -> (i32, i32) {
    %c0_i32 = arith.constant 0 : i32
    %c0_i32_0 = arith.constant 0 : i32
    return %arg0, %c0_i32 : i32, i32
  }
}

</mosaic_0001>

<llo_original>
// kernel: tpu_custom_call.1
$region0: #{tpu_custom_call.1}
  #allocation0 [shape = 'u32[]', space=smem, size = 0x4, offset = 0x4, fixed_abs, tag = 'smem constant byte address 0x4 - core index']
  #allocation1 [shape = 'u32[144,128]{1,0:T(1,128)}', space=vmem, size = 0x12000, scoped, tag = 'internal scratch']
  #allocation2 [shape = 'f32[1,128]{1,0:T(1,128)}', space=vmem, size = 0x200, scoped, tag = 'scratch operand']
  #allocation3 [shape = 'f32[1,128]{1,0:T(1,128)}', space=vmem, size = 0x200, scoped, tag = 'scratch operand']
  #allocation4 [shape = 'f32[1,128]{1,0:T(1,128)}', space=vmem, size = 0x200, scoped, tag = 'scratch operand']
  #allocation5 [shape = 's32[1]{0:T(128)}', space=smem, size = 0x200, scoped, tag = 'scratch operand']
  #allocation6 [shape = 'f32[8,130]{1,0:T(8,128)}', space=vmem, size = 0x2000, scoped, tag = 'scratch operand']
  %s0 = inlined_call_operand.vmem [shape: f32[16,128], index: 0, kind: input, shape index: {}]
  %s1 = inlined_call_operand.vmem [shape: f32[16,128], index: 1, kind: input, shape index: {}]
  %s2 = inlined_call_operand.vmem [shape: f32[1,128], index: 2, kind: input, shape index: {}]
  %s3 = inlined_call_operand.vmem [shape: f32[1,128], index: 3, kind: input, shape index: {}]
  %s4 = inlined_call_operand.vmem [shape: f32[128,130], index: 4, kind: input, shape index: {}]
  %s5 = inlined_call_operand.vmem [shape: f32[128,130], index: 5, kind: input, shape index: {}]
  %s6 = inlined_call_operand.vmem [shape: f32[256,130], index: 6, kind: input, shape index: {}]
  %s7 = inlined_call_operand.vmem [shape: f32[1,130], index: 7, kind: input, shape index: {}]
  %s8 = inlined_call_operand.hbm [shape: f32[1,128], index: 8, kind: output, shape index: {0}]
  %s9 = inlined_call_operand.hbm [shape: f32[1,128], index: 9, kind: output, shape index: {1}]
  %s10 = inlined_call_operand.hbm [shape: f32[17,128], index: 10, kind: output, shape index: {2}]
  %s11 = inlined_call_operand.hbm [shape: s32[1,1], index: 11, kind: output, shape index: {3}]
  %s12 = inlined_call_operand.vmem [shape: f32[16,2], index: 12, kind: output, shape index: {4}]
  %13 = xla_tuple %s8, %s9, %s10, %s11, %s12
  %s14 = sld [smem:[#allocation0]]
  $region137: #{tpu_custom_call.1} parent=0
    _
  %s16 = ssub.s32 1, %s14
  %s17 = scalar_select 0, %s16, %s14
  $region1: #{tpu_custom_call.1} parent=0
    #allocation7 [shape = 'u8[512]{0}', space=vmem, size = 0x400, scoped, tag = 'output window, operand 0, single buffered']
    #allocation8 [shape = 's32[2]{0}', space=sflag, size = 0x8, scoped, tag = 'scoped memory for tpu_custom_call.1']
    #allocation9 [shape = 'u8[512]{0}', space=vmem, size = 0x400, scoped, tag = 'output window, operand 1, single buffered']
    #allocation10 [shape = 's32[1]{0}', space=sflag, size = 0x4, scoped, tag = 'scoped memory for tpu_custom_call.1']
    #allocation11 [shape = 'u8[12288]{0}', space=vmem, size = 0x3000, scoped, tag = 'output window, operand 2, single buffered']
    #allocation12 [shape = 'u8[512]{0}', space=vmem, size = 0x400, scoped, tag = 'output window, operand 3, single buffered']
    #allocation13 [shape = 's32[1]{0}', space=sflag, size = 0x4, scoped, tag = 'scoped memory for tpu_custom_call.1']
    %18 = vsyncpa [#allocation8], 0
    %19 = vsyncpa [#allocation10], 0
    %20 = vsyncpa [#allocation13], 0
    loop: start=0, step=1, limit=4
    $region2: #{tpu_custom_call.1} parent=1 // loop_pre_header
      _
    $region3: #{tpu_custom_call.1} parent=1 // loop_header
      %s22 = sphi 0, %s26
      %p23 = scmp.ge.s32.totalorder %s22, 4
      %s32 = sphi 0, %s34
      %s35 = sphi 0, %s32
      %s36 = sphi 0, %s35
      %s52 = sphi 0, %s36
      %s58 = sphi 0, %s60
      %s61 = sphi 0, %s58
      %s62 = sphi 0, %s61
      %s78 = sphi 0, %s62
      %s82 = sphi 0, %s82
      %s84 = sphi 0, %s82
      %s85 = sphi 0, %s84
      %s99 = sphi 0, %s85
      %s103 = sphi 0, %s103
      %s105 = sphi 0, %s103
      %s106 = sphi 0, %s105
      %s120 = sphi 0, %s106
      %s124 = sphi 0, %s124
      %s126 = sphi 0, %s124
      %s127 = sphi 0, %s126
      %s141 = sphi 0, %s127
      %s145 = sphi 0, %s145
      %s147 = sphi 0, %s145
      %s148 = sphi 0, %s147
      %s162 = sphi 0, %s148
      %s166 = sphi 0, %s166
      %s168 = sphi 0, %s166
      %s169 = sphi 0, %s168
      %s183 = sphi 0, %s169
      %s187 = sphi 0, %s187
      %s189 = sphi 0, %s187
      %s190 = sphi 0, %s189
      %s204 = sphi 0, %s190
      %s208 = sphi 0, %s208
      %s210 = sphi 0, %s208
      %s211 = sphi 0, %s210
      %s225 = sphi 0, %s211
      %s229 = sphi 0, %s229
      %s231 = sphi 0, %s229
      %s232 = sphi 0, %s231
      %s246 = sphi 0, %s232
      %s250 = sphi 0, %s250
      %s252 = sphi 0, %s250
      %s253 = sphi 0, %s252
      %s267 = sphi 0, %s253
      %s271 = sphi 0, %s271
      %s273 = sphi 0, %s271
      %s274 = sphi 0, %s273
      %s288 = sphi 0, %s274
      %s294 = sphi 0, %s296
      %s297 = sphi 0, %s294
      %s298 = sphi 0, %s297
      %s314 = sphi 0, %s298
    $region4: #{tpu_custom_call.1} parent=1 // loop_header_branch
      %25 = sbr.rel (%p23) target = $region8
    $region5: #{tpu_custom_call.1} parent=1 // loop_body
      %s27 = ssub.s32 %s22, 1
      %s28 = ssub.s32 %s22, 2
      %s29 = sadd.s32 %s22, 1
      %s30 = ssub.s32 %s22, %s29
      %p31 = scmp.eq.s32.totalorder %s30, 0
      %s33 = sadd.s32 %s32, 1
      %s34 = scalar_select %p31, %s32, %s33
      %p37 = pneg %p31
      %p38 = scmp.eq.s32.totalorder %s22, 1
      %p39 = por %p37, %p38
      %p40 = scmp.ne.s32.totalorder %s32, %s35
      %p41 = scmp.eq.s32.totalorder %s22, 0
      %p42 = por %p40, %p41
      %p43 = scmp.ne.s32.totalorder %s32, %s35
      %p44 = scmp.eq.s32.totalorder %s27, 1
      %p45 = por %p43, %p44
      %p46 = scmp.ne.s32.totalorder %s35, %s36
      %p47 = scmp.eq.s32.totalorder %s27, 0
      %p48 = por %p46, %p47
      %p49 = scmp.ne.s32.totalorder %s35, %s36
      %p50 = scmp.eq.s32.totalorder %s28, 1
      %p51 = por %p49, %p50
      %p53 = scmp.ne.s32.totalorder %s36, %s52
      %p54 = scmp.eq.s32.totalorder %s28, 0
      %p55 = por %p53, %p54
      %s56 = ssub.s32 %s22, %s29
      %p57 = scmp.eq.s32.totalorder %s56, 0
      %s59 = sadd.s32 %s58, 1
      %s60 = scalar_select %p57, %s58, %s59
      %p63 = pneg %p57
      %p64 = scmp.eq.s32.totalorder %s22, 1
      %p65 = por %p63, %p64
      %p66 = scmp.ne.s32.totalorder %s58, %s61
      %p67 = scmp.eq.s32.totalorder %s22, 0
      %p68 = por %p66, %p67
      %p69 = scmp.ne.s32.totalorder %s58, %s61
      %p70 = scmp.eq.s32.totalorder %s27, 1
      %p71 = por %p69, %p70
      %p72 = scmp.ne.s32.totalorder %s61, %s62
      %p73 = scmp.eq.s32.totalorder %s27, 0
      %p74 = por %p72, %p73
      %p75 = scmp.ne.s32.totalorder %s61, %s62
      %p76 = scmp.eq.s32.totalorder %s28, 1
      %p77 = por %p75, %p76
      %p79 = scmp.ne.s32.totalorder %s62, %s78
      %p80 = scmp.eq.s32.totalorder %s28, 0
      %p81 = por %p79, %p80
      %s83 = sadd.s32 %s82, 1
      %p86 = scmp.eq.s32.totalorder %s22, 1
      %p87 = scmp.ne.s32.totalorder %s82, %s84
      %p88 = scmp.eq.s32.totalorder %s22, 0
      %p89 = por %p87, %p88
      %p90 = scmp.ne.s32.totalorder %s82, %s84
      %p91 = scmp.eq.s32.totalorder %s27, 1
      %p92 = por %p90, %p91
      %p93 = scmp.ne.s32.totalorder %s84, %s85
      %p94 = scmp.eq.s32.totalorder %s27, 0
      %p95 = por %p93, %p94
      %p96 = scmp.ne.s32.totalorder %s84, %s85
      %p97 = scmp.eq.s32.totalorder %s28, 1
      %p98 = por %p96, %p97
      %p100 = scmp.ne.s32.totalorder %s85, %s99
      %p101 = scmp.eq.s32.totalorder %s28, 0
      %p102 = por %p100, %p101
      %s104 = sadd.s32 %s103, 1
      %p107 = scmp.eq.s32.totalorder %s22, 1
      %p108 = scmp.ne.s32.totalorder %s103, %s105
      %p109 = scmp.eq.s32.totalorder %s22, 0
      %p110 = por %p108, %p109
      %p111 = scmp.ne.s32.totalorder %s103, %s105
      %p112 = scmp.eq.s32.totalorder %s27, 1
      %p113 = por %p111, %p112
      %p114 = scmp.ne.s32.totalorder %s105, %s106
      %p115 = scmp.eq.s32.totalorder %s27, 0
      %p116 = por %p114, %p115
      %p117 = scmp.ne.s32.totalorder %s105, %s106
      %p118 = scmp.eq.s32.totalorder %s28, 1
      %p119 = por %p117, %p118
      %p121 = scmp.ne.s32.totalorder %s106, %s120
      %p122 = scmp.eq.s32.totalorder %s28, 0
      %p123 = por %p121, %p122
      %s125 = sadd.s32 %s124, 1
      %p128 = scmp.eq.s32.totalorder %s22, 1
      %p129 = scmp.ne.s32.totalorder %s124, %s126
      %p130 = scmp.eq.s32.totalorder %s22, 0
      %p131 = por %p129, %p130
      %p132 = scmp.ne.s32.totalorder %s124, %s126
      %p133 = scmp.eq.s32.totalorder %s27, 1
      %p134 = por %p132, %p133
      %p135 = scmp.ne.s32.totalorder %s126, %s127
      %p136 = scmp.eq.s32.totalorder %s27, 0
      %p137 = por %p135, %p136
      %p138 = scmp.ne.s32.totalorder %s126, %s127
      %p139 = scmp.eq.s32.totalorder %s28, 1
      %p140 = por %p138, %p139
      %p142 = scmp.ne.s32.totalorder %s127, %s141
      %p143 = scmp.eq.s32.totalorder %s28, 0
      %p144 = por %p142, %p143
      %s146 = sadd.s32 %s145, 1
      %p149 = scmp.eq.s32.totalorder %s22, 1
      %p150 = scmp.ne.s32.totalorder %s145, %s147
      %p151 = scmp.eq.s32.totalorder %s22, 0
      %p152 = por %p150, %p151
      %p153 = scmp.ne.s32.totalorder %s145, %s147
      %p154 = scmp.eq.s32.totalorder %s27, 1
      %p155 = por %p153, %p154
      %p156 = scmp.ne.s32.totalorder %s147, %s148
      %p157 = scmp.eq.s32.totalorder %s27, 0
      %p158 = por %p156, %p157
      %p159 = scmp.ne.s32.totalorder %s147, %s148
      %p160 = scmp.eq.s32.totalorder %s28, 1
      %p161 = por %p159, %p160
      %p163 = scmp.ne.s32.totalorder %s148, %s162
      %p164 = scmp.eq.s32.totalorder %s28, 0
      %p165 = por %p163, %p164
      %s167 = sadd.s32 %s166, 1
      %p170 = scmp.eq.s32.totalorder %s22, 1
      %p171 = scmp.ne.s32.totalorder %s166, %s168
      %p172 = scmp.eq.s32.totalorder %s22, 0
      %p173 = por %p171, %p172
      %p174 = scmp.ne.s32.totalorder %s166, %s168
      %p175 = scmp.eq.s32.totalorder %s27, 1
      %p176 = por %p174, %p175
      %p177 = scmp.ne.s32.totalorder %s168, %s169
      %p178 = scmp.eq.s32.totalorder %s27, 0
      %p179 = por %p177, %p178
      %p180 = scmp.ne.s32.totalorder %s168, %s169
      %p181 = scmp.eq.s32.totalorder %s28, 1
      %p182 = por %p180, %p181
      %p184 = scmp.ne.s32.totalorder %s169, %s183
      %p185 = scmp.eq.s32.totalorder %s28, 0
      %p186 = por %p184, %p185
      %s188 = sadd.s32 %s187, 1
      %p191 = scmp.eq.s32.totalorder %s22, 1
      %p192 = scmp.ne.s32.totalorder %s187, %s189
      %p193 = scmp.eq.s32.totalorder %s22, 0
      %p194 = por %p192, %p193
      %p195 = scmp.ne.s32.totalorder %s187, %s189
      %p196 = scmp.eq.s32.totalorder %s27, 1
      %p197 = por %p195, %p196
      %p198 = scmp.ne.s32.totalorder %s189, %s190
      %p199 = scmp.eq.s32.totalorder %s27, 0
      %p200 = por %p198, %p199
      %p201 = scmp.ne.s32.totalorder %s189, %s190
      %p202 = scmp.eq.s32.totalorder %s28, 1
      %p203 = por %p201, %p202
      %p205 = scmp.ne.s32.totalorder %s190, %s204
      %p206 = scmp.eq.s32.totalorder %s28, 0
      %p207 = por %p205, %p206
      %s209 = sadd.s32 %s208, 1
      %p212 = scmp.eq.s32.totalorder %s22, 1
      %p213 = scmp.ne.s32.totalorder %s208, %s210
      %p214 = scmp.eq.s32.totalorder %s22, 0
      %p215 = por %p213, %p214
      %p216 = scmp.ne.s32.totalorder %s208, %s210
      %p217 = scmp.eq.s32.totalorder %s27, 1
      %p218 = por %p216, %p217
      %p219 = scmp.ne.s32.totalorder %s210, %s211
      %p220 = scmp.eq.s32.totalorder %s27, 0
      %p221 = por %p219, %p220
      %p222 = scmp.ne.s32.totalorder %s210, %s211
      %p223 = scmp.eq.s32.totalorder %s28, 1
      %p224 = por %p222, %p223
      %p226 = scmp.ne.s32.totalorder %s211, %s225
      %p227 = scmp.eq.s32.totalorder %s28, 0
      %p228 = por %p226, %p227
      %s230 = sadd.s32 %s229, 1
      %p233 = scmp.eq.s32.totalorder %s22, 1
      %p234 = scmp.ne.s32.totalorder %s229, %s231
      %p235 = scmp.eq.s32.totalorder %s22, 0
      %p236 = por %p234, %p235
      %p237 = scmp.ne.s32.totalorder %s229, %s231
      %p238 = scmp.eq.s32.totalorder %s27, 1
      %p239 = por %p237, %p238
      %p240 = scmp.ne.s32.totalorder %s231, %s232
      %p241 = scmp.eq.s32.totalorder %s27, 0
      %p242 = por %p240, %p241
      %p243 = scmp.ne.s32.totalorder %s231, %s232
      %p244 = scmp.eq.s32.totalorder %s28, 1
      %p245 = por %p243, %p244
      %p247 = scmp.ne.s32.totalorder %s232, %s246
      %p248 = scmp.eq.s32.totalorder %s28, 0
      %p249 = por %p247, %p248
      %s251 = sadd.s32 %s250, 1
      %p254 = scmp.eq.s32.totalorder %s22, 1
      %p255 = scmp.ne.s32.totalorder %s250, %s252
      %p256 = scmp.eq.s32.totalorder %s22, 0
      %p257 = por %p255, %p256
      %p258 = scmp.ne.s32.totalorder %s250, %s252
      %p259 = scmp.eq.s32.totalorder %s27, 1
      %p260 = por %p258, %p259
      %p261 = scmp.ne.s32.totalorder %s252, %s253
      %p262 = scmp.eq.s32.totalorder %s27, 0
      %p263 = por %p261, %p262
      %p264 = scmp.ne.s32.totalorder %s252, %s253
      %p265 = scmp.eq.s32.totalorder %s28, 1
      %p266 = por %p264, %p265
      %p268 = scmp.ne.s32.totalorder %s253, %s267
      %p269 = scmp.eq.s32.totalorder %s28, 0
      %p270 = por %p268, %p269
      %s272 = sadd.s32 %s271, 1
      %p275 = scmp.eq.s32.totalorder %s22, 1
      %p276 = scmp.ne.s32.totalorder %s271, %s273
      %p277 = scmp.eq.s32.totalorder %s22, 0
      %p278 = por %p276, %p277
      %p279 = scmp.ne.s32.totalorder %s271, %s273
      %p280 = scmp.eq.s32.totalorder %s27, 1
      %p281 = por %p279, %p280
      %p282 = scmp.ne.s32.totalorder %s273, %s274
      %p283 = scmp.eq.s32.totalorder %s27, 0
      %p284 = por %p282, %p283
      %p285 = scmp.ne.s32.totalorder %s273, %s274
      %p286 = scmp.eq.s32.totalorder %s28, 1
      %p287 = por %p285, %p286
      %p289 = scmp.ne.s32.totalorder %s274, %s288
      %p290 = scmp.eq.s32.totalorder %s28, 0
      %p291 = por %p289, %p290
      %s292 = ssub.s32 %s22, %s29
      %p293 = scmp.eq.s32.totalorder %s292, 0
      %s295 = sadd.s32 %s294, 1
      %s296 = scalar_select %p293, %s294, %s295
      %p299 = pneg %p293
      %p300 = scmp.eq.s32.totalorder %s22, 1
      %p301 = por %p299, %p300
      %p302 = scmp.ne.s32.totalorder %s294, %s297
      %p303 = scmp.eq.s32.totalorder %s22, 0
      %p304 = por %p302, %p303
      %p305 = scmp.ne.s32.totalorder %s294, %s297
      %p306 = scmp.eq.s32.totalorder %s27, 1
      %p307 = por %p305, %p306
      %p308 = scmp.ne.s32.totalorder %s297, %s298
      %p309 = scmp.eq.s32.totalorder %s27, 0
      %p310 = por %p308, %p309
      %p311 = scmp.ne.s32.totalorder %s297, %s298
      %p312 = scmp.eq.s32.totalorder %s28, 1
      %p313 = por %p311, %p312
      %p315 = scmp.ne.s32.totalorder %s298, %s314
      %p316 = scmp.eq.s32.totalorder %s28, 0
      %p317 = por %p315, %p316
      %p318 = scmp.le.s32.totalorder 1, %s22
      %p319 = scmp.lt.s32.totalorder %s22, 3
      %p320 = pnand %p318, %p319
      %p321 = pneg %p320
      // Predicated region
      $region9: #{tpu_custom_call.1} parent=5 // pred_check
        _
      $region10: #{tpu_custom_call.1} parent=5 // pred_check_branch
        %323 = sbr.rel (%p320) target = $region12
      $region11: #{tpu_custom_call.1} parent=5 // pred_region
        %s324 = ssub.s32 %s22, 1
        // Predicated region
        $region13: #{tpu_custom_call.1} parent=11 // pred_check
          %p325 = pneg %p95
        $region14: #{tpu_custom_call.1} parent=11 // pred_check_branch
          %327 = sbr.rel (%p325) target = $region16
        $region15: #{tpu_custom_call.1} parent=11 // pred_region
          _
        $region16: #{tpu_custom_call.1} parent=11 // pred_fallthru
          _
        // Predicated region
        $region17: #{tpu_custom_call.1} parent=11 // pred_check
          %p328 = pneg %p116
        $region18: #{tpu_custom_call.1} parent=11 // pred_check_branch
          %330 = sbr.rel (%p328) target = $region20
        $region19: #{tpu_custom_call.1} parent=11 // pred_region
          _
        $region20: #{tpu_custom_call.1} parent=11 // pred_fallthru
          _
        // Predicated region
        $region21: #{tpu_custom_call.1} parent=11 // pred_check
          %p331 = pneg %p137
        $region22: #{tpu_custom_call.1} parent=11 // pred_check_branch
          %333 = sbr.rel (%p331) target = $region24
        $region23: #{tpu_custom_call.1} parent=11 // pred_region
          _
        $region24: #{tpu_custom_call.1} parent=11 // pred_fallthru
          _
        // Predicated region
        $region25: #{tpu_custom_call.1} parent=11 // pred_check
          %p334 = pneg %p158
        $region26: #{tpu_custom_call.1} parent=11 // pred_check_branch
          %336 = sbr.rel (%p334) target = $region28
        $region27: #{tpu_custom_call.1} parent=11 // pred_region
          _
        $region28: #{tpu_custom_call.1} parent=11 // pred_fallthru
          _
        // Predicated region
        $region29: #{tpu_custom_call.1} parent=11 // pred_check
          %p337 = pneg %p179
        $region30: #{tpu_custom_call.1} parent=11 // pred_check_branch
          %339 = sbr.rel (%p337) target = $region32
        $region31: #{tpu_custom_call.1} parent=11 // pred_region
          _
        $region32: #{tpu_custom_call.1} parent=11 // pred_fallthru
          _
        // Predicated region
        $region33: #{tpu_custom_call.1} parent=11 // pred_check
          %p340 = pneg %p200
        $region34: #{tpu_custom_call.1} parent=11 // pred_check_branch
          %342 = sbr.rel (%p340) target = $region36
        $region35: #{tpu_custom_call.1} parent=11 // pred_region
          _
        $region36: #{tpu_custom_call.1} parent=11 // pred_fallthru
          _
      $region12: #{tpu_custom_call.1} parent=5 // pred_fallthru
        _
      %p343 = scmp.lt.s32.totalorder %s22, 2
      // Predicated region
      $region37: #{tpu_custom_call.1} parent=5 // pred_check
        %p344 = pneg %p343
      $region38: #{tpu_custom_call.1} parent=5 // pred_check_branch
        %346 = sbr.rel (%p344) target = $region40
      $region39: #{tpu_custom_call.1} parent=5 // pred_region
        // Predicated region
        $region41: #{tpu_custom_call.1} parent=39 // pred_check
          %p347 = pneg %p42
        $region42: #{tpu_custom_call.1} parent=39 // pred_check_branch
          %349 = sbr.rel (%p347) target = $region44
        $region43: #{tpu_custom_call.1} parent=39 // pred_region
          %p350 = scmp.lt.s32.totalorder %s22, 1
          %s351 = scalar_select %p350, %s22, 1
          %s352 = smul.addr %s351, 8
          %s353 = scalar_lea.vmem %s0, %s352
        $region44: #{tpu_custom_call.1} parent=39 // pred_fallthru
          _
        // Predicated region
        $region45: #{tpu_custom_call.1} parent=39 // pred_check
          %p354 = pneg %p68
        $region46: #{tpu_custom_call.1} parent=39 // pred_check_branch
          %356 = sbr.rel (%p354) target = $region48
        $region47: #{tpu_custom_call.1} parent=39 // pred_region
          %p357 = scmp.lt.s32.totalorder %s22, 1
          %s358 = scalar_select %p357, %s22, 1
          %s359 = smul.addr %s358, 8
          %s360 = scalar_lea.vmem %s1, %s359
        $region48: #{tpu_custom_call.1} parent=39 // pred_fallthru
          _
      $region40: #{tpu_custom_call.1} parent=5 // pred_fallthru
        _
      %p361 = scmp.le.s32.totalorder 1, %s22
      %p362 = scmp.lt.s32.totalorder %s22, 3
      %p363 = pnand %p361, %p362
      %p364 = pneg %p363
      // Predicated region
      $region49: #{tpu_custom_call.1} parent=5 // pred_check
        _
      $region50: #{tpu_custom_call.1} parent=5 // pred_check_branch
        %366 = sbr.rel (%p363) target = $region52
      $region51: #{tpu_custom_call.1} parent=5 // pred_region
        %s367 = ssub.s32 %s22, 1
        %p368 = scmp.lt.s32.totalorder %s27, 1
        %s369 = scalar_select %p368, %s27, 1
        %s370 = smul.addr %s369, 8
        %s371 = scalar_lea.vmem %s0, %s370
        %p372 = pneg %p48
        %p373 = pneg %p45
        %p374 = scmp.lt.s32.totalorder %s27, 1
        %s375 = scalar_select %p374, %s27, 1
        %s376 = smul.addr %s375, 8
        %s377 = scalar_lea.vmem %s1, %s376
        %p378 = pneg %p74
        %p379 = pneg %p71
        %p380 = pneg %p95
        %p381 = pneg %p92
        %p382 = pneg %p116
        %p383 = pneg %p113
        %p384 = pneg %p137
        %p385 = pneg %p134
        %p386 = pneg %p158
        %p387 = pneg %p155
        %p388 = pneg %p179
        %p389 = pneg %p176
        %p390 = pneg %p200
        %p391 = pneg %p197
        %p392 = pneg %p221
        %p393 = pneg %p218
        %p394 = pneg %p242
        %p395 = pneg %p239
        %p396 = pneg %p263
        %p397 = pneg %p260
        %p398 = pneg %p284
        %p399 = pneg %p281
        %p400 = pneg %p310
        %p401 = pneg %p307
        %p402 = scmp.lt.s32.totalorder %s27, 1
        %s403 = scalar_select %p402, %s27, 1
        %s404 = smul.addr %s403, 8
        %s405 = scalar_lea.vmem %s12, %s404
        %p406 = scmp.lt.s32.totalorder %s27, 1
        %s407 = scalar_select %p406, %s27, 1
        %s408 = smul.addr %s407, 8
        %s409 = scalar_lea.vmem %s0, %s408
        %p410 = scmp.lt.s32.totalorder %s27, 1
        %s411 = scalar_select %p410, %s27, 1
        %s412 = smul.addr %s411, 8
        %s413 = scalar_lea.vmem %s1, %s412
        %p414 = scmp.lt.s32.totalorder %s27, 1
        %s415 = scalar_select %p414, %s27, 1
        %s416 = smul.addr %s415, 8
        %s417 = scalar_lea.vmem %s12, %s416
        %p418 = scmp.eq.s32.totalorder %s27, 0
        // Predicated region
        $region53: #{tpu_custom_call.1} parent=51 // pred_check
          %p419 = pneg %p418
        $region54: #{tpu_custom_call.1} parent=51 // pred_check_branch
          %421 = sbr.rel (%p419) target = $region56
        $region55: #{tpu_custom_call.1} parent=51 // pred_region
          %v422 = vld [vmem:[%s2] sm:$0x1]
          %vm423 = vcmask 1040384
          %v424 = vsel %vm423, %v422, 0.0
          %425 = vadd.xlane.f32.xlu0 %v424
          %v426 = vpop.xlane.xlu0 %425
          %v427 = vrot.slane %v426, 4
          %v428 = vadd.f32 %v426, %v427
          %v429 = vrot.slane %v428, 2
          %v430 = vadd.f32 %v428, %v429
          %v431 = vrot.slane %v430, 1
          %v432 = vadd.f32 %v430, %v431
          %s433 = vtos %v432
          %p434 = scmp.ne.f32.partialorder %s433, 0.0
          %435 = vst [vmem:[#allocation11] sm:$0xff] 0.0
          %436 = vst [vmem:[#allocation11 + $0x8] sm:$0xff] 0.0
          %437 = vst [vmem:[#allocation11 + $0x10] sm:$0x1] 0.0
          %s438 = scalar_select %p434, 1, 0
          %v439 = vstv %s438
          %vm440 = vcmp.eq.s32.totalorder %v439, 1
          %v441 = vsel %vm440, %v422, 0.0
          %442 = vst [vmem:[#allocation11] sm:$0x1] %v441
          %443 = vst [vmem:[#allocation4] sm:$0x1] %v441
          %444 = vst [vmem:[#allocation2] sm:$0x1] 0.0
          %v445 = vld [vmem:[%s3] sm:$0x1]
          %446 = vst [vmem:[#allocation3] sm:$0x1] %v445
          %s447 = scalar_lea.smem [#allocation5], 0
          %448 = sst [smem:[%s447]] %s438
        $region56: #{tpu_custom_call.1} parent=51 // pred_fallthru
          _
        %v449 = vld [vmem:[%s409] sm:$0xff]
        %v450 = vld [vmem:[%s4] sm:$0xff]
        %v451 = vld [vmem:[%s4 + $0x8] sm:$0xff]
        %v452 = vld [vmem:[%s4 + $0x10] sm:$0xff]
        %v453 = vld [vmem:[%s4 + $0x18] sm:$0xff]
        %v454 = vld [vmem:[%s4 + $0x20] sm:$0xff]
        %v455 = vld [vmem:[%s4 + $0x28] sm:$0xff]
        %v456 = vld [vmem:[%s4 + $0x30] sm:$0xff]
        %v457 = vld [vmem:[%s4 + $0x38] sm:$0xff]
        %v458 = vld [vmem:[%s4 + $0x40] sm:$0xff]
        %v459 = vld [vmem:[%s4 + $0x48] sm:$0xff]
        %v460 = vld [vmem:[%s4 + $0x50] sm:$0xff]
        %v461 = vld [vmem:[%s4 + $0x58] sm:$0xff]
        %v462 = vld [vmem:[%s4 + $0x60] sm:$0xff]
        %v463 = vld [vmem:[%s4 + $0x68] sm:$0xff]
        %v464 = vld [vmem:[%s4 + $0x70] sm:$0xff]
        %v465 = vld [vmem:[%s4 + $0x78] sm:$0xff]
        %v466 = vld [vmem:[%s4 + $0x80] sm:$0xff]
        %v467 = vld [vmem:[%s4 + $0x88] sm:$0xff]
        %v468 = vld [vmem:[%s4 + $0x90] sm:$0xff]
        %v469 = vld [vmem:[%s4 + $0x98] sm:$0xff]
        %v470 = vld [vmem:[%s4 + $0xa0] sm:$0xff]
        %v471 = vld [vmem:[%s4 + $0xa8] sm:$0xff]
        %v472 = vld [vmem:[%s4 + $0xb0] sm:$0xff]
        %v473 = vld [vmem:[%s4 + $0xb8] sm:$0xff]
        %v474 = vld [vmem:[%s4 + $0xc0] sm:$0xff]
        %v475 = vld [vmem:[%s4 + $0xc8] sm:$0xff]
        %v476 = vld [vmem:[%s4 + $0xd0] sm:$0xff]
        %v477 = vld [vmem:[%s4 + $0xd8] sm:$0xff]
        %v478 = vld [vmem:[%s4 + $0xe0] sm:$0xff]
        %v479 = vld [vmem:[%s4 + $0xe8] sm:$0xff]
        %v480 = vld [vmem:[%s4 + $0xf0] sm:$0xff]
        %v481 = vld [vmem:[%s4 + $0xf8] sm:$0xff]
        %v482 = vld [vmem:[%s413] sm:$0xff]
        %v483 = vld [vmem:[%s5] sm:$0xff]
        %v484 = vld [vmem:[%s5 + $0x8] sm:$0xff]
        %v485 = vld [vmem:[%s5 + $0x10] sm:$0xff]
        %v486 = vld [vmem:[%s5 + $0x18] sm:$0xff]
        %v487 = vld [vmem:[%s5 + $0x20] sm:$0xff]
        %v488 = vld [vmem:[%s5 + $0x28] sm:$0xff]
        %v489 = vld [vmem:[%s5 + $0x30] sm:$0xff]
        %v490 = vld [vmem:[%s5 + $0x38] sm:$0xff]
        %v491 = vld [vmem:[%s5 + $0x40] sm:$0xff]
        %v492 = vld [vmem:[%s5 + $0x48] sm:$0xff]
        %v493 = vld [vmem:[%s5 + $0x50] sm:$0xff]
        %v494 = vld [vmem:[%s5 + $0x58] sm:$0xff]
        %v495 = vld [vmem:[%s5 + $0x60] sm:$0xff]
        %v496 = vld [vmem:[%s5 + $0x68] sm:$0xff]
        %v497 = vld [vmem:[%s5 + $0x70] sm:$0xff]
        %v498 = vld [vmem:[%s5 + $0x78] sm:$0xff]
        %v499 = vld [vmem:[%s5 + $0x80] sm:$0xff]
        %v500 = vld [vmem:[%s5 + $0x88] sm:$0xff]
        %v501 = vld [vmem:[%s5 + $0x90] sm:$0xff]
        %v502 = vld [vmem:[%s5 + $0x98] sm:$0xff]
        %v503 = vld [vmem:[%s5 + $0xa0] sm:$0xff]
        %v504 = vld [vmem:[%s5 + $0xa8] sm:$0xff]
        %v505 = vld [vmem:[%s5 + $0xb0] sm:$0xff]
        %v506 = vld [vmem:[%s5 + $0xb8] sm:$0xff]
        %v507 = vld [vmem:[%s5 + $0xc0] sm:$0xff]
        %v508 = vld [vmem:[%s5 + $0xc8] sm:$0xff]
        %v509 = vld [vmem:[%s5 + $0xd0] sm:$0xff]
        %v510 = vld [vmem:[%s5 + $0xd8] sm:$0xff]
        %v511 = vld [vmem:[%s5 + $0xe0] sm:$0xff]
        %v512 = vld [vmem:[%s5 + $0xe8] sm:$0xff]
        %v513 = vld [vmem:[%s5 + $0xf0] sm:$0xff]
        %v514 = vld [vmem:[%s5 + $0xf8] sm:$0xff]
        %515 = vmatprep.subr.mxu0 %v484
        %516 = vmatpush1.msra.mxu0 %v483
        %517 = vmatprep.subr.mxu0 %v486
        %518 = vmatpush1.msra.mxu0 %v485
        %519 = vmatprep.subr.mxu0 %v488
        %520 = vmatpush1.msra.mxu0 %v487
        %521 = vmatprep.subr.mxu0 %v490
        %522 = vmatpush1.msra.mxu0 %v489
        %523 = vmatprep.subr.mxu0 %v492
        %524 = vmatpush1.msra.mxu0 %v491
        %525 = vmatprep.subr.mxu0 %v494
        %526 = vmatpush1.msra.mxu0 %v493
        %527 = vmatprep.subr.mxu0 %v496
        %528 = vmatpush1.msra.mxu0 %v495
        %529 = vmatprep.subr.mxu0 %v498
        %530 = vmatpush1.msra.mxu0 %v497
        %531 = vmatprep.subr.mxu0 %v500
        %532 = vmatpush1.msra.mxu0 %v499
        %533 = vmatprep.subr.mxu0 %v502
        %534 = vmatpush1.msra.mxu0 %v501
        %535 = vmatprep.subr.mxu0 %v504
        %536 = vmatpush1.msra.mxu0 %v503
        %537 = vmatprep.subr.mxu0 %v506
        %538 = vmatpush1.msra.mxu0 %v505
        %539 = vmatprep.subr.mxu0 %v508
        %540 = vmatpush1.msra.mxu0 %v507
        %541 = vmatprep.subr.mxu0 %v510
        %542 = vmatpush1.msra.mxu0 %v509
        %543 = vmatprep.subr.mxu0 %v512
        %544 = vmatpush1.msra.mxu0 %v511
        %545 = vmatprep.subr.mxu0 %v514
        %546 = vmatpush1.msra.mxu0 %v513
        %547 = vmatprep.subr.mxu0 0.0
        %548 = vmatpush1.msra.mxu0 0.0
        %549 = vmatprep.subr.mxu0 0.0
        %550 = vmatpush1.msra.mxu0 0.0
        %551 = vmatprep.subr.mxu0 0.0
        %552 = vmatpush1.msra.mxu0 0.0
        %553 = vmatprep.subr.mxu0 0.0
        %554 = vmatpush1.msra.mxu0 0.0
        %555 = vmatprep.subr.mxu0 0.0
        %556 = vmatpush1.msra.mxu0 0.0
        %557 = vmatprep.subr.mxu0 0.0
        %558 = vmatpush1.msra.mxu0 0.0
        %559 = vmatprep.subr.mxu0 0.0
        %560 = vmatpush1.msra.mxu0 0.0
        %561 = vmatprep.subr.mxu0 0.0
        %562 = vmatpush1.msra.mxu0 0.0
        %563 = vmatprep.subr.mxu0 0.0
        %564 = vmatpush1.msra.mxu0 0.0
        %565 = vmatprep.subr.mxu0 0.0
        %566 = vmatpush1.msra.mxu0 0.0
        %567 = vmatprep.subr.mxu0 0.0
        %568 = vmatpush1.msra.mxu0 0.0
        %569 = vmatprep.subr.mxu0 0.0
        %570 = vmatpush1.msra.mxu0 0.0
        %571 = vmatprep.subr.mxu0 0.0
        %572 = vmatpush1.msra.mxu0 0.0
        %573 = vmatprep.subr.mxu0 0.0
        %574 = vmatpush1.msra.mxu0 0.0
        %575 = vmatprep.subr.mxu0 0.0
        %576 = vmatpush1.msra.mxu0 0.0
        %577 = vmatprep.subr.mxu0 0.0
        %578 = vmatpush1.msra.mxu0 0.0
        %579 = vmatprep.mubr.f32.mxu0 0.0
        %580 = vmatmul.mubr.f32.gmra.mrb[0].mxu0 %v482
        %v581 = vpop.f32.mrb[0].mxu0
        %v582 = vadd.f32 0.0, %v581
        %v583 = vpop.f32.mrb[0].mxu0
        %v584 = vadd.f32 0.0, %v583
        %585 = vdwg.mxu0
        %586 = vmatprep.subr.mxu0 %v451
        %587 = vmatpush1.msra.mxu0 %v450
        %588 = vmatprep.subr.mxu0 %v453
        %589 = vmatpush1.msra.mxu0 %v452
        %590 = vmatprep.subr.mxu0 %v455
        %591 = vmatpush1.msra.mxu0 %v454
        %592 = vmatprep.subr.mxu0 %v457
        %593 = vmatpush1.msra.mxu0 %v456
        %594 = vmatprep.subr.mxu0 %v459
        %595 = vmatpush1.msra.mxu0 %v458
        %596 = vmatprep.subr.mxu0 %v461
        %597 = vmatpush1.msra.mxu0 %v460
        %598 = vmatprep.subr.mxu0 %v463
        %599 = vmatpush1.msra.mxu0 %v462
        %600 = vmatprep.subr.mxu0 %v465
        %601 = vmatpush1.msra.mxu0 %v464
        %602 = vmatprep.subr.mxu0 %v467
        %603 = vmatpush1.msra.mxu0 %v466
        %604 = vmatprep.subr.mxu0 %v469
        %605 = vmatpush1.msra.mxu0 %v468
        %606 = vmatprep.subr.mxu0 %v471
        %607 = vmatpush1.msra.mxu0 %v470
        %608 = vmatprep.subr.mxu0 %v473
        %609 = vmatpush1.msra.mxu0 %v472
        %610 = vmatprep.subr.mxu0 %v475
        %611 = vmatpush1.msra.mxu0 %v474
        %612 = vmatprep.subr.mxu0 %v477
        %613 = vmatpush1.msra.mxu0 %v476
        %614 = vmatprep.subr.mxu0 %v479
        %615 = vmatpush1.msra.mxu0 %v478
        %616 = vmatprep.subr.mxu0 %v481
        %617 = vmatpush1.msra.mxu0 %v480
        %618 = vmatprep.subr.mxu0 0.0
        %619 = vmatpush1.msra.mxu0 0.0
        %620 = vmatprep.subr.mxu0 0.0
        %621 = vmatpush1.msra.mxu0 0.0
        %622 = vmatprep.subr.mxu0 0.0
        %623 = vmatpush1.msra.mxu0 0.0
        %624 = vmatprep.subr.mxu0 0.0
        %625 = vmatpush1.msra.mxu0 0.0
        %626 = vmatprep.subr.mxu0 0.0
        %627 = vmatpush1.msra.mxu0 0.0
        %628 = vmatprep.subr.mxu0 0.0
        %629 = vmatpush1.msra.mxu0 0.0
        %630 = vmatprep.subr.mxu0 0.0
        %631 = vmatpush1.msra.mxu0 0.0
        %632 = vmatprep.subr.mxu0 0.0
        %633 = vmatpush1.msra.mxu0 0.0
        %634 = vmatprep.subr.mxu0 0.0
        %635 = vmatpush1.msra.mxu0 0.0
        %636 = vmatprep.subr.mxu0 0.0
        %637 = vmatpush1.msra.mxu0 0.0
        %638 = vmatprep.subr.mxu0 0.0
        %639 = vmatpush1.msra.mxu0 0.0
        %640 = vmatprep.subr.mxu0 0.0
        %641 = vmatpush1.msra.mxu0 0.0
        %642 = vmatprep.subr.mxu0 0.0
        %643 = vmatpush1.msra.mxu0 0.0
        %644 = vmatprep.subr.mxu0 0.0
        %645 = vmatpush1.msra.mxu0 0.0
        %646 = vmatprep.subr.mxu0 0.0
        %647 = vmatpush1.msra.mxu0 0.0
        %648 = vmatprep.subr.mxu0 0.0
        %649 = vmatpush1.msra.mxu0 0.0
        %650 = vmatprep.mubr.f32.mxu0 0.0
        %651 = vmatmul.mubr.f32.gmra.mrb[0].mxu0 %v449
        %v652 = vpop.f32.mrb[0].mxu0
        %v653 = vadd.f32 %v582, %v652
        %v654 = vpop.f32.mrb[0].mxu0
        %v655 = vadd.f32 %v584, %v654
        %656 = vdwg.mxu0
        %v657 = vld [vmem:[%s7] sm:$0x3]
        %v659 = vlaneseq
        %v660 = vshrl.u32 %v659, 7
        %v661 = vsub.s32 0, %v660
        %v662 = vrot.slane %v657, %v661
        %v663 = vlaneseq
        %v664 = vshrl.u32 %v663, 7
        %v665 = vsub.s32 1, %v664
        %v666 = vrot.slane %v657, %v665
        %v669 = vadd.f32 %v653, %v662
        %v670 = vadd.f32 %v655, %v666
        %671 = vst [vmem:[#allocation6] sm:$0xff] %v669
        %vm672 = vcmask 15360
        %673 = vst.msk [vmem:[#allocation6 + $0x8] sm:$0xff] %vm672, %v670
        %v674 = vld [vmem:[%s6] sm:$0xff]
        %v675 = vld [vmem:[%s6 + $0x8] sm:$0xff]
        %v676 = vld [vmem:[%s6 + $0x10] sm:$0xff]
        %v677 = vld [vmem:[%s6 + $0x18] sm:$0xff]
        %v678 = vld [vmem:[%s6 + $0x20] sm:$0xff]
        %v679 = vld [vmem:[%s6 + $0x28] sm:$0xff]
        %v680 = vld [vmem:[%s6 + $0x30] sm:$0xff]
        %v681 = vld [vmem:[%s6 + $0x38] sm:$0xff]
        %v682 = vld [vmem:[%s6 + $0x40] sm:$0xff]
        %v683 = vld [vmem:[%s6 + $0x48] sm:$0xff]
        %v684 = vld [vmem:[%s6 + $0x50] sm:$0xff]
        %v685 = vld [vmem:[%s6 + $0x58] sm:$0xff]
        %v686 = vld [vmem:[%s6 + $0x60] sm:$0xff]
        %v687 = vld [vmem:[%s6 + $0x68] sm:$0xff]
        %v688 = vld [vmem:[%s6 + $0x70] sm:$0xff]
        %v689 = vld [vmem:[%s6 + $0x78] sm:$0xff]
        %v690 = vld [vmem:[%s6 + $0x80] sm:$0xff]
        %v691 = vld [vmem:[%s6 + $0x88] sm:$0xff]
        %v692 = vld [vmem:[%s6 + $0x90] sm:$0xff]
        %v693 = vld [vmem:[%s6 + $0x98] sm:$0xff]
        %v694 = vld [vmem:[%s6 + $0xa0] sm:$0xff]
        %v695 = vld [vmem:[%s6 + $0xa8] sm:$0xff]
        %v696 = vld [vmem:[%s6 + $0xb0] sm:$0xff]
        %v697 = vld [vmem:[%s6 + $0xb8] sm:$0xff]
        %v698 = vld [vmem:[%s6 + $0xc0] sm:$0xff]
        %v699 = vld [vmem:[%s6 + $0xc8] sm:$0xff]
        %v700 = vld [vmem:[%s6 + $0xd0] sm:$0xff]
        %v701 = vld [vmem:[%s6 + $0xd8] sm:$0xff]
        %v702 = vld [vmem:[%s6 + $0xe0] sm:$0xff]
        %v703 = vld [vmem:[%s6 + $0xe8] sm:$0xff]
        %v704 = vld [vmem:[%s6 + $0xf0] sm:$0xff]
        %v705 = vld [vmem:[%s6 + $0xf8] sm:$0xff]
        %v706 = vld [vmem:[%s6 + $0x100] sm:$0xff]
        %v707 = vld [vmem:[%s6 + $0x108] sm:$0xff]
        %v708 = vld [vmem:[%s6 + $0x110] sm:$0xff]
        %v709 = vld [vmem:[%s6 + $0x118] sm:$0xff]
        %v710 = vld [vmem:[%s6 + $0x120] sm:$0xff]
        %v711 = vld [vmem:[%s6 + $0x128] sm:$0xff]
        %v712 = vld [vmem:[%s6 + $0x130] sm:$0xff]
        %v713 = vld [vmem:[%s6 + $0x138] sm:$0xff]
        %v714 = vld [vmem:[%s6 + $0x140] sm:$0xff]
        %v715 = vld [vmem:[%s6 + $0x148] sm:$0xff]
        %v716 = vld [vmem:[%s6 + $0x150] sm:$0xff]
        %v717 = vld [vmem:[%s6 + $0x158] sm:$0xff]
        %v718 = vld [vmem:[%s6 + $0x160] sm:$0xff]
        %v719 = vld [vmem:[%s6 + $0x168] sm:$0xff]
        %v720 = vld [vmem:[%s6 + $0x170] sm:$0xff]
        %v721 = vld [vmem:[%s6 + $0x178] sm:$0xff]
        %v722 = vld [vmem:[%s6 + $0x180] sm:$0xff]
        %v723 = vld [vmem:[%s6 + $0x188] sm:$0xff]
        %v724 = vld [vmem:[%s6 + $0x190] sm:$0xff]
        %v725 = vld [vmem:[%s6 + $0x198] sm:$0xff]
        %v726 = vld [vmem:[%s6 + $0x1a0] sm:$0xff]
        %v727 = vld [vmem:[%s6 + $0x1a8] sm:$0xff]
        %v728 = vld [vmem:[%s6 + $0x1b0] sm:$0xff]
        %v729 = vld [vmem:[%s6 + $0x1b8] sm:$0xff]
        %v730 = vld [vmem:[%s6 + $0x1c0] sm:$0xff]
        %v731 = vld [vmem:[%s6 + $0x1c8] sm:$0xff]
        %v732 = vld [vmem:[%s6 + $0x1d0] sm:$0xff]
        %v733 = vld [vmem:[%s6 + $0x1d8] sm:$0xff]
        %v734 = vld [vmem:[%s6 + $0x1e0] sm:$0xff]
        %v735 = vld [vmem:[%s6 + $0x1e8] sm:$0xff]
        %v736 = vld [vmem:[%s6 + $0x1f0] sm:$0xff]
        %v737 = vld [vmem:[%s6 + $0x1f8] sm:$0xff]
        %v738 = vld [vmem:[#allocation2] sm:$0x1]
        %v739 = vld [vmem:[#allocation3] sm:$0x1]
        %v740 = vld [vmem:[#allocation4] sm:$0x1]
        %s741 = sld [smem:[#allocation5]]
        %v742 = vld [vmem:[#allocation6] ss:$8 sm:$0x3]
        %743 = vmatprep.subr.mxu0 %v675
        %744 = vmatpush1.msra.mxu0 %v674
        %745 = vmatprep.subr.mxu0 %v677
        %746 = vmatpush1.msra.mxu0 %v676
        %747 = vmatprep.subr.mxu0 %v679
        %748 = vmatpush1.msra.mxu0 %v678
        %749 = vmatprep.subr.mxu0 %v681
        %750 = vmatpush1.msra.mxu0 %v680
        %751 = vmatprep.subr.mxu0 %v683
        %752 = vmatpush1.msra.mxu0 %v682
        %753 = vmatprep.subr.mxu0 %v685
        %754 = vmatpush1.msra.mxu0 %v684
        %755 = vmatprep.subr.mxu0 %v687
        %756 = vmatpush1.msra.mxu0 %v686
        %757 = vmatprep.subr.mxu0 %v689
        %758 = vmatpush1.msra.mxu0 %v688
        %759 = vmatprep.subr.mxu0 %v691
        %760 = vmatpush1.msra.mxu0 %v690
        %761 = vmatprep.subr.mxu0 %v693
        %762 = vmatpush1.msra.mxu0 %v692
        %763 = vmatprep.subr.mxu0 %v695
        %764 = vmatpush1.msra.mxu0 %v694
        %765 = vmatprep.subr.mxu0 %v697
        %766 = vmatpush1.msra.mxu0 %v696
        %767 = vmatprep.subr.mxu0 %v699
        %768 = vmatpush1.msra.mxu0 %v698
        %769 = vmatprep.subr.mxu0 %v701
        %770 = vmatpush1.msra.mxu0 %v700
        %771 = vmatprep.subr.mxu0 %v703
        %772 = vmatpush1.msra.mxu0 %v702
        %773 = vmatprep.subr.mxu0 %v705
        %774 = vmatpush1.msra.mxu0 %v704
        %775 = vmatprep.subr.mxu0 %v707
        %776 = vmatpush1.msra.mxu0 %v706
        %777 = vmatprep.subr.mxu0 %v709
        %778 = vmatpush1.msra.mxu0 %v708
        %779 = vmatprep.subr.mxu0 %v711
        %780 = vmatpush1.msra.mxu0 %v710
        %781 = vmatprep.subr.mxu0 %v713
        %782 = vmatpush1.msra.mxu0 %v712
        %783 = vmatprep.subr.mxu0 %v715
        %784 = vmatpush1.msra.mxu0 %v714
        %785 = vmatprep.subr.mxu0 %v717
        %786 = vmatpush1.msra.mxu0 %v716
        %787 = vmatprep.subr.mxu0 %v719
        %788 = vmatpush1.msra.mxu0 %v718
        %789 = vmatprep.subr.mxu0 %v721
        %790 = vmatpush1.msra.mxu0 %v720
        %791 = vmatprep.subr.mxu0 %v723
        %792 = vmatpush1.msra.mxu0 %v722
        %793 = vmatprep.subr.mxu0 %v725
        %794 = vmatpush1.msra.mxu0 %v724
        %795 = vmatprep.subr.mxu0 %v727
        %796 = vmatpush1.msra.mxu0 %v726
        %797 = vmatprep.subr.mxu0 %v729
        %798 = vmatpush1.msra.mxu0 %v728
        %799 = vmatprep.subr.mxu0 %v731
        %800 = vmatpush1.msra.mxu0 %v730
        %801 = vmatprep.subr.mxu0 %v733
        %802 = vmatpush1.msra.mxu0 %v732
        %803 = vmatprep.subr.mxu0 %v735
        %804 = vmatpush1.msra.mxu0 %v734
        %805 = vmatprep.subr.mxu0 %v737
        %806 = vmatpush1.msra.mxu0 %v736
        %807 = vmatprep.mubr.f32.mxu0 %v738
        %808 = vmatmul.mubr.f32.gmra.mrb[0].mxu0 %v739
        %v809 = vpop.f32.mrb[0].mxu0
        %v810 = vadd.f32 0.0, %v809
        %v811 = vpop.f32.mrb[0].mxu0
        %v812 = vadd.f32 0.0, %v811
        %813 = vdwg.mxu0
        %v816 = vcombine.low %v810, %v812
        %v818 = vunpack.c.l.s4 1966171168
        %v819 = vunpack.c.0.s8 %v818
        %v820 = vlaneseq
        %v821 = vshrl.u32 %v820, 7
        %v822 = vsub.s32 %v819, %v821
        %v823 = vrot.slane %v816, %v822
        %v825 = vunpack.c.l.s4 1966171168
        %v826 = vunpack.c.0.s8 %v825
        %v827 = vlaneseq
        %v828 = vshrl.u32 %v827, 7
        %v829 = vsub.s32 %v826, %v828
        %v830 = vrot.slane %v823, %v829
        %v832 = vadd.f32 %v742, %v830
        %v833 = vtanh.pop %v832
        %v835 = vlaneseq
        %v836 = vshrl.u32 %v835, 7
        %v837 = vsub.s32 1, %v836
        %v838 = vrot.slane %v832, %v837
        %vm840 = vcmask 8192
        %841 = vst.msk [vmem:[%s417] sm:$0x1] %vm840, %v838
        %v842 = vrot.slane %v832, 1
        %843 = vrot.lane.b32.xlu0 %v842, 127
        %v844 = vpop.permute.xlu0 %843
        %s845 = vtos %v844
        %s846 = vtos %v842
        %p847 = scmp.gt.f32.partialorder %s845, %s846
        %v848 = vld [vmem:[%s409] sm:$0x1]
        // Predicated region
        $region57: #{tpu_custom_call.1} parent=51 // pred_check
          %p849 = pneg %p847
        $region58: #{tpu_custom_call.1} parent=51 // pred_check_branch
          %851 = sbr.rel (%p849) target = $region60
        $region59: #{tpu_custom_call.1} parent=51 // pred_region
          %s852 = scalar_lea.vmem [#allocation11], %s741
          %853 = vst [vmem:[%s852] sm:$0x1] %v848
        $region60: #{tpu_custom_call.1} parent=51 // pred_fallthru
          _
        %v854 = vadd.f32 %v740, %v848
        %s855 = scalar_select %p847, 1, 0
        %v856 = vstv %s855
        %vm857 = vcmp.eq.s32.totalorder %v856, 1
        %v858 = vsel %vm857, %v854, %v740
        %s859 = sadd.s32 %s741, 1
        %s860 = scalar_select %p847, %s859, %s741
        %p861 = scmp.gt.s32.totalorder %s860, 1
        %s862 = scalar_select %p861, %s860, 1
        %s863 = scvt.s32.f32 %s862
        %v864 = vstv %s863
        %v865 = vrcp.pop %v864
        %v866 = vmul.f32 %v858, %v865
        %v867 = vsel %vm857, %v866, %v739
        %s868 = scalar_lea.vmem [#allocation6], 1
        %v869 = vld [vmem:[%s868] ss:$8 sm:$0x3]
        %870 = vmatprep.subr.mxu0 %v675
        %871 = vmatpush1.msra.mxu0 %v674
        %872 = vmatprep.subr.mxu0 %v677
        %873 = vmatpush1.msra.mxu0 %v676
        %874 = vmatprep.subr.mxu0 %v679
        %875 = vmatpush1.msra.mxu0 %v678
        %876 = vmatprep.subr.mxu0 %v681
        %877 = vmatpush1.msra.mxu0 %v680
        %878 = vmatprep.subr.mxu0 %v683
        %879 = vmatpush1.msra.mxu0 %v682
        %880 = vmatprep.subr.mxu0 %v685
        %881 = vmatpush1.msra.mxu0 %v684
        %882 = vmatprep.subr.mxu0 %v687
        %883 = vmatpush1.msra.mxu0 %v686
        %884 = vmatprep.subr.mxu0 %v689
        %885 = vmatpush1.msra.mxu0 %v688
        %886 = vmatprep.subr.mxu0 %v691
        %887 = vmatpush1.msra.mxu0 %v690
        %888 = vmatprep.subr.mxu0 %v693
        %889 = vmatpush1.msra.mxu0 %v692
        %890 = vmatprep.subr.mxu0 %v695
        %891 = vmatpush1.msra.mxu0 %v694
        %892 = vmatprep.subr.mxu0 %v697
        %893 = vmatpush1.msra.mxu0 %v696
        %894 = vmatprep.subr.mxu0 %v699
        %895 = vmatpush1.msra.mxu0 %v698
        %896 = vmatprep.subr.mxu0 %v701
        %897 = vmatpush1.msra.mxu0 %v700
        %898 = vmatprep.subr.mxu0 %v703
        %899 = vmatpush1.msra.mxu0 %v702
        %900 = vmatprep.subr.mxu0 %v705
        %901 = vmatpush1.msra.mxu0 %v704
        %902 = vmatprep.subr.mxu0 %v707
        %903 = vmatpush1.msra.mxu0 %v706
        %904 = vmatprep.subr.mxu0 %v709
        %905 = vmatpush1.msra.mxu0 %v708
        %906 = vmatprep.subr.mxu0 %v711
        %907 = vmatpush1.msra.mxu0 %v710
        %908 = vmatprep.subr.mxu0 %v713
        %909 = vmatpush1.msra.mxu0 %v712
        %910 = vmatprep.subr.mxu0 %v715
        %911 = vmatpush1.msra.mxu0 %v714
        %912 = vmatprep.subr.mxu0 %v717
        %913 = vmatpush1.msra.mxu0 %v716
        %914 = vmatprep.subr.mxu0 %v719
        %915 = vmatpush1.msra.mxu0 %v718
        %916 = vmatprep.subr.mxu0 %v721
        %917 = vmatpush1.msra.mxu0 %v720
        %918 = vmatprep.subr.mxu0 %v723
        %919 = vmatpush1.msra.mxu0 %v722
        %920 = vmatprep.subr.mxu0 %v725
        %921 = vmatpush1.msra.mxu0 %v724
        %922 = vmatprep.subr.mxu0 %v727
        %923 = vmatpush1.msra.mxu0 %v726
        %924 = vmatprep.subr.mxu0 %v729
        %925 = vmatpush1.msra.mxu0 %v728
        %926 = vmatprep.subr.mxu0 %v731
        %927 = vmatpush1.msra.mxu0 %v730
        %928 = vmatprep.subr.mxu0 %v733
        %929 = vmatpush1.msra.mxu0 %v732
        %930 = vmatprep.subr.mxu0 %v735
        %931 = vmatpush1.msra.mxu0 %v734
        %932 = vmatprep.subr.mxu0 %v737
        %933 = vmatpush1.msra.mxu0 %v736
        %934 = vmatprep.mubr.f32.mxu0 %v833
        %935 = vmatmul.mubr.f32.gmra.mrb[0].mxu0 %v867
        %v936 = vpop.f32.mrb[0].mxu0
        %v937 = vadd.f32 0.0, %v936
        %v938 = vpop.f32.mrb[0].mxu0
        %v939 = vadd.f32 0.0, %v938
        %940 = vdwg.mxu0
        %v943 = vcombine.low %v937, %v939
        %v945 = vunpack.c.l.s4 1966171168
        %v946 = vunpack.c.0.s8 %v945
        %v947 = vlaneseq
        %v948 = vshrl.u32 %v947, 7
        %v949 = vsub.s32 %v946, %v948
        %v950 = vrot.slane %v943, %v949
        %v952 = vunpack.c.l.s4 1966171168
        %v953 = vunpack.c.0.s8 %v952
        %v954 = vlaneseq
        %v955 = vshrl.u32 %v954, 7
        %v956 = vsub.s32 %v953, %v955
        %v957 = vrot.slane %v950, %v956
        %v959 = vadd.f32 %v869, %v957
        %v960 = vtanh.pop %v959
        %v962 = vlaneseq
        %v963 = vshrl.u32 %v962, 7
        %v964 = vsub.s32 1, %v963
        %v965 = vrot.slane %v959, %v964
        %967 = vst.msk [vmem:[%s417 + $0x1] sm:$0x1] %vm840, %v965
        %v968 = vrot.slane %v959, 1
        %969 = vrot.lane.b32.xlu0 %v968, 127
        %v970 = vpop.permute.xlu0 %969
        %s971 = vtos %v970
        %s972 = vtos %v968
        %p973 = scmp.gt.f32.partialorder %s971, %s972
        %v974 = vld [vmem:[%s409 + $0x1] sm:$0x1]
        // Predicated region
        $region61: #{tpu_custom_call.1} parent=51 // pred_check
          %p975 = pneg %p973
        $region62: #{tpu_custom_call.1} parent=51 // pred_check_branch
          %977 = sbr.rel (%p975) target = $region64
        $region63: #{tpu_custom_call.1} parent=51 // pred_region
          %s978 = scalar_lea.vmem [#allocation11], %s860
          %979 = vst [vmem:[%s978] sm:$0x1] %v974
        $region64: #{tpu_custom_call.1} parent=51 // pred_fallthru
          _
        %v980 = vadd.f32 %v858, %v974
        %s981 = scalar_select %p973, 1, 0
        %v982 = vstv %s981
        %vm983 = vcmp.eq.s32.totalorder %v982, 1
        %v984 = vsel %vm983, %v980, %v858
        %s985 = sadd.s32 %s860, 1
        %s986 = scalar_select %p973, %s985, %s860
        %p987 = scmp.gt.s32.totalorder %s986, 1
        %s988 = scalar_select %p987, %s986, 1
        %s989 = scvt.s32.f32 %s988
        %v990 = vstv %s989
        %v991 = vrcp.pop %v990
        %v992 = vmul.f32 %v984, %v991
        %v993 = vsel %vm983, %v992, %v867
        %s994 = scalar_lea.vmem [#allocation6], 2
        %v995 = vld [vmem:[%s994] ss:$8 sm:$0x3]
        %996 = vmatprep.subr.mxu0 %v675
        %997 = vmatpush1.msra.mxu0 %v674
        %998 = vmatprep.subr.mxu0 %v677
        %999 = vmatpush1.msra.mxu0 %v676
        %1000 = vmatprep.subr.mxu0 %v679
        %1001 = vmatpush1.msra.mxu0 %v678
        %1002 = vmatprep.subr.mxu0 %v681
        %1003 = vmatpush1.msra.mxu0 %v680
        %1004 = vmatprep.subr.mxu0 %v683
        %1005 = vmatpush1.msra.mxu0 %v682
        %1006 = vmatprep.subr.mxu0 %v685
        %1007 = vmatpush1.msra.mxu0 %v684
        %1008 = vmatprep.subr.mxu0 %v687
        %1009 = vmatpush1.msra.mxu0 %v686
        %1010 = vmatprep.subr.mxu0 %v689
        %1011 = vmatpush1.msra.mxu0 %v688
        %1012 = vmatprep.subr.mxu0 %v691
        %1013 = vmatpush1.msra.mxu0 %v690
        %1014 = vmatprep.subr.mxu0 %v693
        %1015 = vmatpush1.msra.mxu0 %v692
        %1016 = vmatprep.subr.mxu0 %v695
        %1017 = vmatpush1.msra.mxu0 %v694
        %1018 = vmatprep.subr.mxu0 %v697
        %1019 = vmatpush1.msra.mxu0 %v696
        %1020 = vmatprep.subr.mxu0 %v699
        %1021 = vmatpush1.msra.mxu0 %v698
        %1022 = vmatprep.subr.mxu0 %v701
        %1023 = vmatpush1.msra.mxu0 %v700
        %1024 = vmatprep.subr.mxu0 %v703
        %1025 = vmatpush1.msra.mxu0 %v702
        %1026 = vmatprep.subr.mxu0 %v705
        %1027 = vmatpush1.msra.mxu0 %v704
        %1028 = vmatprep.subr.mxu0 %v707
        %1029 = vmatpush1.msra.mxu0 %v706
        %1030 = vmatprep.subr.mxu0 %v709
        %1031 = vmatpush1.msra.mxu0 %v708
        %1032 = vmatprep.subr.mxu0 %v711
        %1033 = vmatpush1.msra.mxu0 %v710
        %1034 = vmatprep.subr.mxu0 %v713
        %1035 = vmatpush1.msra.mxu0 %v712
        %1036 = vmatprep.subr.mxu0 %v715
        %1037 = vmatpush1.msra.mxu0 %v714
        %1038 = vmatprep.subr.mxu0 %v717
        %1039 = vmatpush1.msra.mxu0 %v716
        %1040 = vmatprep.subr.mxu0 %v719
        %1041 = vmatpush1.msra.mxu0 %v718
        %1042 = vmatprep.subr.mxu0 %v721
        %1043 = vmatpush1.msra.mxu0 %v720
        %1044 = vmatprep.subr.mxu0 %v723
        %1045 = vmatpush1.msra.mxu0 %v722
        %1046 = vmatprep.subr.mxu0 %v725
        %1047 = vmatpush1.msra.mxu0 %v724
        %1048 = vmatprep.subr.mxu0 %v727
        %1049 = vmatpush1.msra.mxu0 %v726
        %1050 = vmatprep.subr.mxu0 %v729
        %1051 = vmatpush1.msra.mxu0 %v728
        %1052 = vmatprep.subr.mxu0 %v731
        %1053 = vmatpush1.msra.mxu0 %v730
        %1054 = vmatprep.subr.mxu0 %v733
        %1055 = vmatpush1.msra.mxu0 %v732
        %1056 = vmatprep.subr.mxu0 %v735
        %1057 = vmatpush1.msra.mxu0 %v734
        %1058 = vmatprep.subr.mxu0 %v737
        %1059 = vmatpush1.msra.mxu0 %v736
        %1060 = vmatprep.mubr.f32.mxu0 %v960
        %1061 = vmatmul.mubr.f32.gmra.mrb[0].mxu0 %v993
        %v1062 = vpop.f32.mrb[0].mxu0
        %v1063 = vadd.f32 0.0, %v1062
        %v1064 = vpop.f32.mrb[0].mxu0
        %v1065 = vadd.f32 0.0, %v1064
        %1066 = vdwg.mxu0
        %v1069 = vcombine.low %v1063, %v1065
        %v1071 = vunpack.c.l.s4 1966171168
        %v1072 = vunpack.c.0.s8 %v1071
        %v1073 = vlaneseq
        %v1074 = vshrl.u32 %v1073, 7
        %v1075 = vsub.s32 %v1072, %v1074
        %v1076 = vrot.slane %v1069, %v1075
        %v1078 = vunpack.c.l.s4 1966171168
        %v1079 = vunpack.c.0.s8 %v1078
        %v1080 = vlaneseq
        %v1081 = vshrl.u32 %v1080, 7
        %v1082 = vsub.s32 %v1079, %v1081
        %v1083 = vrot.slane %v1076, %v1082
        %v1085 = vadd.f32 %v995, %v1083
        %v1086 = vtanh.pop %v1085
        %v1088 = vlaneseq
        %v1089 = vshrl.u32 %v1088, 7
        %v1090 = vsub.s32 1, %v1089
        %v1091 = vrot.slane %v1085, %v1090
        %1093 = vst.msk [vmem:[%s417 + $0x2] sm:$0x1] %vm840, %v1091
        %v1094 = vrot.slane %v1085, 1
        %1095 = vrot.lane.b32.xlu0 %v1094, 127
        %v1096 = vpop.permute.xlu0 %1095
        %s1097 = vtos %v1096
        %s1098 = vtos %v1094
        %p1099 = scmp.gt.f32.partialorder %s1097, %s1098
        %v1100 = vld [vmem:[%s409 + $0x2] sm:$0x1]
        // Predicated region
        $region65: #{tpu_custom_call.1} parent=51 // pred_check
          %p1101 = pneg %p1099
        $region66: #{tpu_custom_call.1} parent=51 // pred_check_branch
          %1103 = sbr.rel (%p1101) target = $region68
        $region67: #{tpu_custom_call.1} parent=51 // pred_region
          %s1104 = scalar_lea.vmem [#allocation11], %s986
          %1105 = vst [vmem:[%s1104] sm:$0x1] %v1100
        $region68: #{tpu_custom_call.1} parent=51 // pred_fallthru
          _
        %v1106 = vadd.f32 %v984, %v1100
        %s1107 = scalar_select %p1099, 1, 0
        %v1108 = vstv %s1107
        %vm1109 = vcmp.eq.s32.totalorder %v1108, 1
        %v1110 = vsel %vm1109, %v1106, %v984
        %s1111 = sadd.s32 %s986, 1
        %s1112 = scalar_select %p1099, %s1111, %s986
        %p1113 = scmp.gt.s32.totalorder %s1112, 1
        %s1114 = scalar_select %p1113, %s1112, 1
        %s1115 = scvt.s32.f32 %s1114
        %v1116 = vstv %s1115
        %v1117 = vrcp.pop %v1116
        %v1118 = vmul.f32 %v1110, %v1117
        %v1119 = vsel %vm1109, %v1118, %v993
        %s1120 = scalar_lea.vmem [#allocation6], 3
        %v1121 = vld [vmem:[%s1120] ss:$8 sm:$0x3]
        %1122 = vmatprep.subr.mxu0 %v675
        %1123 = vmatpush1.msra.mxu0 %v674
        %1124 = vmatprep.subr.mxu0 %v677
        %1125 = vmatpush1.msra.mxu0 %v676
        %1126 = vmatprep.subr.mxu0 %v679
        %1127 = vmatpush1.msra.mxu0 %v678
        %1128 = vmatprep.subr.mxu0 %v681
        %1129 = vmatpush1.msra.mxu0 %v680
        %1130 = vmatprep.subr.mxu0 %v683
        %1131 = vmatpush1.msra.mxu0 %v682
        %1132 = vmatprep.subr.mxu0 %v685
        %1133 = vmatpush1.msra.mxu0 %v684
        %1134 = vmatprep.subr.mxu0 %v687
        %1135 = vmatpush1.msra.mxu0 %v686
        %1136 = vmatprep.subr.mxu0 %v689
        %1137 = vmatpush1.msra.mxu0 %v688
        %1138 = vmatprep.subr.mxu0 %v691
        %1139 = vmatpush1.msra.mxu0 %v690
        %1140 = vmatprep.subr.mxu0 %v693
        %1141 = vmatpush1.msra.mxu0 %v692
        %1142 = vmatprep.subr.mxu0 %v695
        %1143 = vmatpush1.msra.mxu0 %v694
        %1144 = vmatprep.subr.mxu0 %v697
        %1145 = vmatpush1.msra.mxu0 %v696
        %1146 = vmatprep.subr.mxu0 %v699
        %1147 = vmatpush1.msra.mxu0 %v698
        %1148 = vmatprep.subr.mxu0 %v701
        %1149 = vmatpush1.msra.mxu0 %v700
        %1150 = vmatprep.subr.mxu0 %v703
        %1151 = vmatpush1.msra.mxu0 %v702
        %1152 = vmatprep.subr.mxu0 %v705
        %1153 = vmatpush1.msra.mxu0 %v704
        %1154 = vmatprep.subr.mxu0 %v707
        %1155 = vmatpush1.msra.mxu0 %v706
        %1156 = vmatprep.subr.mxu0 %v709
        %1157 = vmatpush1.msra.mxu0 %v708
        %1158 = vmatprep.subr.mxu0 %v711
        %1159 = vmatpush1.msra.mxu0 %v710
        %1160 = vmatprep.subr.mxu0 %v713
        %1161 = vmatpush1.msra.mxu0 %v712
        %1162 = vmatprep.subr.mxu0 %v715
        %1163 = vmatpush1.msra.mxu0 %v714
        %1164 = vmatprep.subr.mxu0 %v717
        %1165 = vmatpush1.msra.mxu0 %v716
        %1166 = vmatprep.subr.mxu0 %v719
        %1167 = vmatpush1.msra.mxu0 %v718
        %1168 = vmatprep.subr.mxu0 %v721
        %1169 = vmatpush1.msra.mxu0 %v720
        %1170 = vmatprep.subr.mxu0 %v723
        %1171 = vmatpush1.msra.mxu0 %v722
        %1172 = vmatprep.subr.mxu0 %v725
        %1173 = vmatpush1.msra.mxu0 %v724
        %1174 = vmatprep.subr.mxu0 %v727
        %1175 = vmatpush1.msra.mxu0 %v726
        %1176 = vmatprep.subr.mxu0 %v729
        %1177 = vmatpush1.msra.mxu0 %v728
        %1178 = vmatprep.subr.mxu0 %v731
        %1179 = vmatpush1.msra.mxu0 %v730
        %1180 = vmatprep.subr.mxu0 %v733
        %1181 = vmatpush1.msra.mxu0 %v732
        %1182 = vmatprep.subr.mxu0 %v735
        %1183 = vmatpush1.msra.mxu0 %v734
        %1184 = vmatprep.subr.mxu0 %v737
        %1185 = vmatpush1.msra.mxu0 %v736
        %1186 = vmatprep.mubr.f32.mxu0 %v1086
        %1187 = vmatmul.mubr.f32.gmra.mrb[0].mxu0 %v1119
        %v1188 = vpop.f32.mrb[0].mxu0
        %v1189 = vadd.f32 0.0, %v1188
        %v1190 = vpop.f32.mrb[0].mxu0
        %v1191 = vadd.f32 0.0, %v1190
        %1192 = vdwg.mxu0
        %v1195 = vcombine.low %v1189, %v1191
        %v1197 = vunpack.c.l.s4 1966171168
        %v1198 = vunpack.c.0.s8 %v1197
        %v1199 = vlaneseq
        %v1200 = vshrl.u32 %v1199, 7
        %v1201 = vsub.s32 %v1198, %v1200
        %v1202 = vrot.slane %v1195, %v1201
        %v1204 = vunpack.c.l.s4 1966171168
        %v1205 = vunpack.c.0.s8 %v1204
        %v1206 = vlaneseq
        %v1207 = vshrl.u32 %v1206, 7
        %v1208 = vsub.s32 %v1205, %v1207
        %v1209 = vrot.slane %v1202, %v1208
        %v1211 = vadd.f32 %v1121, %v1209
        %v1212 = vtanh.pop %v1211
        %v1214 = vlaneseq
        %v1215 = vshrl.u32 %v1214, 7
        %v1216 = vsub.s32 1, %v1215
        %v1217 = vrot.slane %v1211, %v1216
        %1219 = vst.msk [vmem:[%s417 + $0x3] sm:$0x1] %vm840, %v1217
        %v1220 = vrot.slane %v1211, 1
        %1221 = vrot.lane.b32.xlu0 %v1220, 127
        %v1222 = vpop.permute.xlu0 %1221
        %s1223 = vtos %v1222
        %s1224 = vtos %v1220
        %p1225 = scmp.gt.f32.partialorder %s1223, %s1224
        %v1226 = vld [vmem:[%s409 + $0x3] sm:$0x1]
        // Predicated region
        $region69: #{tpu_custom_call.1} parent=51 // pred_check
          %p1227 = pneg %p1225
        $region70: #{tpu_custom_call.1} parent=51 // pred_check_branch
          %1229 = sbr.rel (%p1227) target = $region72
        $region71: #{tpu_custom_call.1} parent=51 // pred_region
          %s1230 = scalar_lea.vmem [#allocation11], %s1112
          %1231 = vst [vmem:[%s1230] sm:$0x1] %v1226
        $region72: #{tpu_custom_call.1} parent=51 // pred_fallthru
          _
        %v1232 = vadd.f32 %v1110, %v1226
        %s1233 = scalar_select %p1225, 1, 0
        %v1234 = vstv %s1233
        %vm1235 = vcmp.eq.s32.totalorder %v1234, 1
        %v1236 = vsel %vm1235, %v1232, %v1110
        %s1237 = sadd.s32 %s1112, 1
        %s1238 = scalar_select %p1225, %s1237, %s1112
        %p1239 = scmp.gt.s32.totalorder %s1238, 1
        %s1240 = scalar_select %p1239, %s1238, 1
        %s1241 = scvt.s32.f32 %s1240
        %v1242 = vstv %s1241
        %v1243 = vrcp.pop %v1242
        %v1244 = vmul.f32 %v1236, %v1243
        %v1245 = vsel %vm1235, %v1244, %v1119
        %s1246 = scalar_lea.vmem [#allocation6], 4
        %v1247 = vld [vmem:[%s1246] ss:$8 sm:$0x3]
        %1248 = vmatprep.subr.mxu0 %v675
        %1249 = vmatpush1.msra.mxu0 %v674
        %1250 = vmatprep.subr.mxu0 %v677
        %1251 = vmatpush1.msra.mxu0 %v676
        %1252 = vmatprep.subr.mxu0 %v679
        %1253 = vmatpush1.msra.mxu0 %v678
        %1254 = vmatprep.subr.mxu0 %v681
        %1255 = vmatpush1.msra.mxu0 %v680
        %1256 = vmatprep.subr.mxu0 %v683
        %1257 = vmatpush1.msra.mxu0 %v682
        %1258 = vmatprep.subr.mxu0 %v685
        %1259 = vmatpush1.msra.mxu0 %v684
        %1260 = vmatprep.subr.mxu0 %v687
        %1261 = vmatpush1.msra.mxu0 %v686
        %1262 = vmatprep.subr.mxu0 %v689
        %1263 = vmatpush1.msra.mxu0 %v688
        %1264 = vmatprep.subr.mxu0 %v691
        %1265 = vmatpush1.msra.mxu0 %v690
        %1266 = vmatprep.subr.mxu0 %v693
        %1267 = vmatpush1.msra.mxu0 %v692
        %1268 = vmatprep.subr.mxu0 %v695
        %1269 = vmatpush1.msra.mxu0 %v694
        %1270 = vmatprep.subr.mxu0 %v697
        %1271 = vmatpush1.msra.mxu0 %v696
        %1272 = vmatprep.subr.mxu0 %v699
        %1273 = vmatpush1.msra.mxu0 %v698
        %1274 = vmatprep.subr.mxu0 %v701
        %1275 = vmatpush1.msra.mxu0 %v700
        %1276 = vmatprep.subr.mxu0 %v703
        %1277 = vmatpush1.msra.mxu0 %v702
        %1278 = vmatprep.subr.mxu0 %v705
        %1279 = vmatpush1.msra.mxu0 %v704
        %1280 = vmatprep.subr.mxu0 %v707
        %1281 = vmatpush1.msra.mxu0 %v706
        %1282 = vmatprep.subr.mxu0 %v709
        %1283 = vmatpush1.msra.mxu0 %v708
        %1284 = vmatprep.subr.mxu0 %v711
        %1285 = vmatpush1.msra.mxu0 %v710
        %1286 = vmatprep.subr.mxu0 %v713
        %1287 = vmatpush1.msra.mxu0 %v712
        %1288 = vmatprep.subr.mxu0 %v715
        %1289 = vmatpush1.msra.mxu0 %v714
        %1290 = vmatprep.subr.mxu0 %v717
        %1291 = vmatpush1.msra.mxu0 %v716
        %1292 = vmatprep.subr.mxu0 %v719
        %1293 = vmatpush1.msra.mxu0 %v718
        %1294 = vmatprep.subr.mxu0 %v721
        %1295 = vmatpush1.msra.mxu0 %v720
        %1296 = vmatprep.subr.mxu0 %v723
        %1297 = vmatpush1.msra.mxu0 %v722
        %1298 = vmatprep.subr.mxu0 %v725
        %1299 = vmatpush1.msra.mxu0 %v724
        %1300 = vmatprep.subr.mxu0 %v727
        %1301 = vmatpush1.msra.mxu0 %v726
        %1302 = vmatprep.subr.mxu0 %v729
        %1303 = vmatpush1.msra.mxu0 %v728
        %1304 = vmatprep.subr.mxu0 %v731
        %1305 = vmatpush1.msra.mxu0 %v730
        %1306 = vmatprep.subr.mxu0 %v733
        %1307 = vmatpush1.msra.mxu0 %v732
        %1308 = vmatprep.subr.mxu0 %v735
        %1309 = vmatpush1.msra.mxu0 %v734
        %1310 = vmatprep.subr.mxu0 %v737
        %1311 = vmatpush1.msra.mxu0 %v736
        %1312 = vmatprep.mubr.f32.mxu0 %v1212
        %1313 = vmatmul.mubr.f32.gmra.mrb[0].mxu0 %v1245
        %v1314 = vpop.f32.mrb[0].mxu0
        %v1315 = vadd.f32 0.0, %v1314
        %v1316 = vpop.f32.mrb[0].mxu0
        %v1317 = vadd.f32 0.0, %v1316
        %1318 = vdwg.mxu0
        %v1321 = vcombine.low %v1315, %v1317
        %v1323 = vunpack.c.l.s4 1966171168
        %v1324 = vunpack.c.0.s8 %v1323
        %v1325 = vlaneseq
        %v1326 = vshrl.u32 %v1325, 7
        %v1327 = vsub.s32 %v1324, %v1326
        %v1328 = vrot.slane %v1321, %v1327
        %v1330 = vunpack.c.l.s4 1966171168
        %v1331 = vunpack.c.0.s8 %v1330
        %v1332 = vlaneseq
        %v1333 = vshrl.u32 %v1332, 7
        %v1334 = vsub.s32 %v1331, %v1333
        %v1335 = vrot.slane %v1328, %v1334
        %v1337 = vadd.f32 %v1247, %v1335
        %v1338 = vtanh.pop %v1337
        %v1340 = vlaneseq
        %v1341 = vshrl.u32 %v1340, 7
        %v1342 = vsub.s32 1, %v1341
        %v1343 = vrot.slane %v1337, %v1342
        %1345 = vst.msk [vmem:[%s417 + $0x4] sm:$0x1] %vm840, %v1343
        %v1346 = vrot.slane %v1337, 1
        %1347 = vrot.lane.b32.xlu0 %v1346, 127
        %v1348 = vpop.permute.xlu0 %1347
        %s1349 = vtos %v1348
        %s1350 = vtos %v1346
        %p1351 = scmp.gt.f32.partialorder %s1349, %s1350
        %v1352 = vld [vmem:[%s409 + $0x4] sm:$0x1]
        // Predicated region
        $region73: #{tpu_custom_call.1} parent=51 // pred_check
          %p1353 = pneg %p1351
        $region74: #{tpu_custom_call.1} parent=51 // pred_check_branch
          %1355 = sbr.rel (%p1353) target = $region76
        $region75: #{tpu_custom_call.1} parent=51 // pred_region
          %s1356 = scalar_lea.vmem [#allocation11], %s1238
          %1357 = vst [vmem:[%s1356] sm:$0x1] %v1352
        $region76: #{tpu_custom_call.1} parent=51 // pred_fallthru
          _
        %v1358 = vadd.f32 %v1236, %v1352
        %s1359 = scalar_select %p1351, 1, 0
        %v1360 = vstv %s1359
        %vm1361 = vcmp.eq.s32.totalorder %v1360, 1
        %v1362 = vsel %vm1361, %v1358, %v1236
        %s1363 = sadd.s32 %s1238, 1
        %s1364 = scalar_select %p1351, %s1363, %s1238
        %p1365 = scmp.gt.s32.totalorder %s1364, 1
        %s1366 = scalar_select %p1365, %s1364, 1
        %s1367 = scvt.s32.f32 %s1366
        %v1368 = vstv %s1367
        %v1369 = vrcp.pop %v1368
        %v1370 = vmul.f32 %v1362, %v1369
        %v1371 = vsel %vm1361, %v1370, %v1245
        %s1372 = scalar_lea.vmem [#allocation6], 5
        %v1373 = vld [vmem:[%s1372] ss:$8 sm:$0x3]
        %1374 = vmatprep.subr.mxu0 %v675
        %1375 = vmatpush1.msra.mxu0 %v674
        %1376 = vmatprep.subr.mxu0 %v677
        %1377 = vmatpush1.msra.mxu0 %v676
        %1378 = vmatprep.subr.mxu0 %v679
        %1379 = vmatpush1.msra.mxu0 %v678
        %1380 = vmatprep.subr.mxu0 %v681
        %1381 = vmatpush1.msra.mxu0 %v680
        %1382 = vmatprep.subr.mxu0 %v683
        %1383 = vmatpush1.msra.mxu0 %v682
        %1384 = vmatprep.subr.mxu0 %v685
        %1385 = vmatpush1.msra.mxu0 %v684
        %1386 = vmatprep.subr.mxu0 %v687
        %1387 = vmatpush1.msra.mxu0 %v686
        %1388 = vmatprep.subr.mxu0 %v689
        %1389 = vmatpush1.msra.mxu0 %v688
        %1390 = vmatprep.subr.mxu0 %v691
        %1391 = vmatpush1.msra.mxu0 %v690
        %1392 = vmatprep.subr.mxu0 %v693
        %1393 = vmatpush1.msra.mxu0 %v692
        %1394 = vmatprep.subr.mxu0 %v695
        %1395 = vmatpush1.msra.mxu0 %v694
        %1396 = vmatprep.subr.mxu0 %v697
        %1397 = vmatpush1.msra.mxu0 %v696
        %1398 = vmatprep.subr.mxu0 %v699
        %1399 = vmatpush1.msra.mxu0 %v698
        %1400 = vmatprep.subr.mxu0 %v701
        %1401 = vmatpush1.msra.mxu0 %v700
        %1402 = vmatprep.subr.mxu0 %v703
        %1403 = vmatpush1.msra.mxu0 %v702
        %1404 = vmatprep.subr.mxu0 %v705
        %1405 = vmatpush1.msra.mxu0 %v704
        %1406 = vmatprep.subr.mxu0 %v707
        %1407 = vmatpush1.msra.mxu0 %v706
        %1408 = vmatprep.subr.mxu0 %v709
        %1409 = vmatpush1.msra.mxu0 %v708
        %1410 = vmatprep.subr.mxu0 %v711
        %1411 = vmatpush1.msra.mxu0 %v710
        %1412 = vmatprep.subr.mxu0 %v713
        %1413 = vmatpush1.msra.mxu0 %v712
        %1414 = vmatprep.subr.mxu0 %v715
        %1415 = vmatpush1.msra.mxu0 %v714
        %1416 = vmatprep.subr.mxu0 %v717
        %1417 = vmatpush1.msra.mxu0 %v716
        %1418 = vmatprep.subr.mxu0 %v719
        %1419 = vmatpush1.msra.mxu0 %v718
        %1420 = vmatprep.subr.mxu0 %v721
        %1421 = vmatpush1.msra.mxu0 %v720
        %1422 = vmatprep.subr.mxu0 %v723
        %1423 = vmatpush1.msra.mxu0 %v722
        %1424 = vmatprep.subr.mxu0 %v725
        %1425 = vmatpush1.msra.mxu0 %v724
        %1426 = vmatprep.subr.mxu0 %v727
        %1427 = vmatpush1.msra.mxu0 %v726
        %1428 = vmatprep.subr.mxu0 %v729
        %1429 = vmatpush1.msra.mxu0 %v728
        %1430 = vmatprep.subr.mxu0 %v731
        %1431 = vmatpush1.msra.mxu0 %v730
        %1432 = vmatprep.subr.mxu0 %v733
        %1433 = vmatpush1.msra.mxu0 %v732
        %1434 = vmatprep.subr.mxu0 %v735
        %1435 = vmatpush1.msra.mxu0 %v734
        %1436 = vmatprep.subr.mxu0 %v737
        %1437 = vmatpush1.msra.mxu0 %v736
        %1438 = vmatprep.mubr.f32.mxu0 %v1338
        %1439 = vmatmul.mubr.f32.gmra.mrb[0].mxu0 %v1371
        %v1440 = vpop.f32.mrb[0].mxu0
        %v1441 = vadd.f32 0.0, %v1440
        %v1442 = vpop.f32.mrb[0].mxu0
        %v1443 = vadd.f32 0.0, %v1442
        %1444 = vdwg.mxu0
        %v1447 = vcombine.low %v1441, %v1443
        %v1449 = vunpack.c.l.s4 1966171168
        %v1450 = vunpack.c.0.s8 %v1449
        %v1451 = vlaneseq
        %v1452 = vshrl.u32 %v1451, 7
        %v1453 = vsub.s32 %v1450, %v1452
        %v1454 = vrot.slane %v1447, %v1453
        %v1456 = vunpack.c.l.s4 1966171168
        %v1457 = vunpack.c.0.s8 %v1456
        %v1458 = vlaneseq
        %v1459 = vshrl.u32 %v1458, 7
        %v1460 = vsub.s32 %v1457, %v1459
        %v1461 = vrot.slane %v1454, %v1460
        %v1463 = vadd.f32 %v1373, %v1461
        %v1464 = vtanh.pop %v1463
        %v1466 = vlaneseq
        %v1467 = vshrl.u32 %v1466, 7
        %v1468 = vsub.s32 1, %v1467
        %v1469 = vrot.slane %v1463, %v1468
        %1471 = vst.msk [vmem:[%s417 + $0x5] sm:$0x1] %vm840, %v1469
        %v1472 = vrot.slane %v1463, 1
        %1473 = vrot.lane.b32.xlu0 %v1472, 127
        %v1474 = vpop.permute.xlu0 %1473
        %s1475 = vtos %v1474
        %s1476 = vtos %v1472
        %p1477 = scmp.gt.f32.partialorder %s1475, %s1476
        %v1478 = vld [vmem:[%s409 + $0x5] sm:$0x1]
        // Predicated region
        $region77: #{tpu_custom_call.1} parent=51 // pred_check
          %p1479 = pneg %p1477
        $region78: #{tpu_custom_call.1} parent=51 // pred_check_branch
          %1481 = sbr.rel (%p1479) target = $region80
        $region79: #{tpu_custom_call.1} parent=51 // pred_region
          %s1482 = scalar_lea.vmem [#allocation11], %s1364
          %1483 = vst [vmem:[%s1482] sm:$0x1] %v1478
        $region80: #{tpu_custom_call.1} parent=51 // pred_fallthru
          _
        %v1484 = vadd.f32 %v1362, %v1478
        %s1485 = scalar_select %p1477, 1, 0
        %v1486 = vstv %s1485
        %vm1487 = vcmp.eq.s32.totalorder %v1486, 1
        %v1488 = vsel %vm1487, %v1484, %v1362
        %s1489 = sadd.s32 %s1364, 1
        %s1490 = scalar_select %p1477, %s1489, %s1364
        %p1491 = scmp.gt.s32.totalorder %s1490, 1
        %s1492 = scalar_select %p1491, %s1490, 1
        %s1493 = scvt.s32.f32 %s1492
        %v1494 = vstv %s1493
        %v1495 = vrcp.pop %v1494
        %v1496 = vmul.f32 %v1488, %v1495
        %v1497 = vsel %vm1487, %v1496, %v1371
        %s1498 = scalar_lea.vmem [#allocation6], 6
        %v1499 = vld [vmem:[%s1498] ss:$8 sm:$0x3]
        %1500 = vmatprep.subr.mxu0 %v675
        %1501 = vmatpush1.msra.mxu0 %v674
        %1502 = vmatprep.subr.mxu0 %v677
        %1503 = vmatpush1.msra.mxu0 %v676
        %1504 = vmatprep.subr.mxu0 %v679
        %1505 = vmatpush1.msra.mxu0 %v678
        %1506 = vmatprep.subr.mxu0 %v681
        %1507 = vmatpush1.msra.mxu0 %v680
        %1508 = vmatprep.subr.mxu0 %v683
        %1509 = vmatpush1.msra.mxu0 %v682
        %1510 = vmatprep.subr.mxu0 %v685
        %1511 = vmatpush1.msra.mxu0 %v684
        %1512 = vmatprep.subr.mxu0 %v687
        %1513 = vmatpush1.msra.mxu0 %v686
        %1514 = vmatprep.subr.mxu0 %v689
        %1515 = vmatpush1.msra.mxu0 %v688
        %1516 = vmatprep.subr.mxu0 %v691
        %1517 = vmatpush1.msra.mxu0 %v690
        %1518 = vmatprep.subr.mxu0 %v693
        %1519 = vmatpush1.msra.mxu0 %v692
        %1520 = vmatprep.subr.mxu0 %v695
        %1521 = vmatpush1.msra.mxu0 %v694
        %1522 = vmatprep.subr.mxu0 %v697
        %1523 = vmatpush1.msra.mxu0 %v696
        %1524 = vmatprep.subr.mxu0 %v699
        %1525 = vmatpush1.msra.mxu0 %v698
        %1526 = vmatprep.subr.mxu0 %v701
        %1527 = vmatpush1.msra.mxu0 %v700
        %1528 = vmatprep.subr.mxu0 %v703
        %1529 = vmatpush1.msra.mxu0 %v702
        %1530 = vmatprep.subr.mxu0 %v705
        %1531 = vmatpush1.msra.mxu0 %v704
        %1532 = vmatprep.subr.mxu0 %v707
        %1533 = vmatpush1.msra.mxu0 %v706
        %1534 = vmatprep.subr.mxu0 %v709
        %1535 = vmatpush1.msra.mxu0 %v708
        %1536 = vmatprep.subr.mxu0 %v711
        %1537 = vmatpush1.msra.mxu0 %v710
        %1538 = vmatprep.subr.mxu0 %v713
        %1539 = vmatpush1.msra.mxu0 %v712
        %1540 = vmatprep.subr.mxu0 %v715
        %1541 = vmatpush1.msra.mxu0 %v714
        %1542 = vmatprep.subr.mxu0 %v717
        %1543 = vmatpush1.msra.mxu0 %v716
        %1544 = vmatprep.subr.mxu0 %v719
        %1545 = vmatpush1.msra.mxu0 %v718
        %1546 = vmatprep.subr.mxu0 %v721
        %1547 = vmatpush1.msra.mxu0 %v720
        %1548 = vmatprep.subr.mxu0 %v723
        %1549 = vmatpush1.msra.mxu0 %v722
        %1550 = vmatprep.subr.mxu0 %v725
        %1551 = vmatpush1.msra.mxu0 %v724
        %1552 = vmatprep.subr.mxu0 %v727
        %1553 = vmatpush1.msra.mxu0 %v726
        %1554 = vmatprep.subr.mxu0 %v729
        %1555 = vmatpush1.msra.mxu0 %v728
        %1556 = vmatprep.subr.mxu0 %v731
        %1557 = vmatpush1.msra.mxu0 %v730
        %1558 = vmatprep.subr.mxu0 %v733
        %1559 = vmatpush1.msra.mxu0 %v732
        %1560 = vmatprep.subr.mxu0 %v735
        %1561 = vmatpush1.msra.mxu0 %v734
        %1562 = vmatprep.subr.mxu0 %v737
        %1563 = vmatpush1.msra.mxu0 %v736
        %1564 = vmatprep.mubr.f32.mxu0 %v1464
        %1565 = vmatmul.mubr.f32.gmra.mrb[0].mxu0 %v1497
        %v1566 = vpop.f32.mrb[0].mxu0
        %v1567 = vadd.f32 0.0, %v1566
        %v1568 = vpop.f32.mrb[0].mxu0
        %v1569 = vadd.f32 0.0, %v1568
        %1570 = vdwg.mxu0
        %v1573 = vcombine.low %v1567, %v1569
        %v1575 = vunpack.c.l.s4 1966171168
        %v1576 = vunpack.c.0.s8 %v1575
        %v1577 = vlaneseq
        %v1578 = vshrl.u32 %v1577, 7
        %v1579 = vsub.s32 %v1576, %v1578
        %v1580 = vrot.slane %v1573, %v1579
        %v1582 = vunpack.c.l.s4 1966171168
        %v1583 = vunpack.c.0.s8 %v1582
        %v1584 = vlaneseq
        %v1585 = vshrl.u32 %v1584, 7
        %v1586 = vsub.s32 %v1583, %v1585
        %v1587 = vrot.slane %v1580, %v1586
        %v1589 = vadd.f32 %v1499, %v1587
        %v1590 = vtanh.pop %v1589
        %v1592 = vlaneseq
        %v1593 = vshrl.u32 %v1592, 7
        %v1594 = vsub.s32 1, %v1593
        %v1595 = vrot.slane %v1589, %v1594
        %1597 = vst.msk [vmem:[%s417 + $0x6] sm:$0x1] %vm840, %v1595
        %v1598 = vrot.slane %v1589, 1
        %1599 = vrot.lane.b32.xlu0 %v1598, 127
        %v1600 = vpop.permute.xlu0 %1599
        %s1601 = vtos %v1600
        %s1602 = vtos %v1598
        %p1603 = scmp.gt.f32.partialorder %s1601, %s1602
        %v1604 = vld [vmem:[%s409 + $0x6] sm:$0x1]
        // Predicated region
        $region81: #{tpu_custom_call.1} parent=51 // pred_check
          %p1605 = pneg %p1603
        $region82: #{tpu_custom_call.1} parent=51 // pred_check_branch
          %1607 = sbr.rel (%p1605) target = $region84
        $region83: #{tpu_custom_call.1} parent=51 // pred_region
          %s1608 = scalar_lea.vmem [#allocation11], %s1490
          %1609 = vst [vmem:[%s1608] sm:$0x1] %v1604
        $region84: #{tpu_custom_call.1} parent=51 // pred_fallthru
          _
        %v1610 = vadd.f32 %v1488, %v1604
        %s1611 = scalar_select %p1603, 1, 0
        %v1612 = vstv %s1611
        %vm1613 = vcmp.eq.s32.totalorder %v1612, 1
        %v1614 = vsel %vm1613, %v1610, %v1488
        %s1615 = sadd.s32 %s1490, 1
        %s1616 = scalar_select %p1603, %s1615, %s1490
        %p1617 = scmp.gt.s32.totalorder %s1616, 1
        %s1618 = scalar_select %p1617, %s1616, 1
        %s1619 = scvt.s32.f32 %s1618
        %v1620 = vstv %s1619
        %v1621 = vrcp.pop %v1620
        %v1622 = vmul.f32 %v1614, %v1621
        %v1623 = vsel %vm1613, %v1622, %v1497
        %s1624 = scalar_lea.vmem [#allocation6], 7
        %v1625 = vld [vmem:[%s1624] ss:$8 sm:$0x3]
        %1626 = vmatprep.subr.mxu0 %v675
        %1627 = vmatpush1.msra.mxu0 %v674
        %1628 = vmatprep.subr.mxu0 %v677
        %1629 = vmatpush1.msra.mxu0 %v676
        %1630 = vmatprep.subr.mxu0 %v679
        %1631 = vmatpush1.msra.mxu0 %v678
        %1632 = vmatprep.subr.mxu0 %v681
        %1633 = vmatpush1.msra.mxu0 %v680
        %1634 = vmatprep.subr.mxu0 %v683
        %1635 = vmatpush1.msra.mxu0 %v682
        %1636 = vmatprep.subr.mxu0 %v685
        %1637 = vmatpush1.msra.mxu0 %v684
        %1638 = vmatprep.subr.mxu0 %v687
        %1639 = vmatpush1.msra.mxu0 %v686
        %1640 = vmatprep.subr.mxu0 %v689
        %1641 = vmatpush1.msra.mxu0 %v688
        %1642 = vmatprep.subr.mxu0 %v691
        %1643 = vmatpush1.msra.mxu0 %v690
        %1644 = vmatprep.subr.mxu0 %v693
        %1645 = vmatpush1.msra.mxu0 %v692
        %1646 = vmatprep.subr.mxu0 %v695
        %1647 = vmatpush1.msra.mxu0 %v694
        %1648 = vmatprep.subr.mxu0 %v697
        %1649 = vmatpush1.msra.mxu0 %v696
        %1650 = vmatprep.subr.mxu0 %v699
        %1651 = vmatpush1.msra.mxu0 %v698
        %1652 = vmatprep.subr.mxu0 %v701
        %1653 = vmatpush1.msra.mxu0 %v700
        %1654 = vmatprep.subr.mxu0 %v703
        %1655 = vmatpush1.msra.mxu0 %v702
        %1656 = vmatprep.subr.mxu0 %v705
        %1657 = vmatpush1.msra.mxu0 %v704
        %1658 = vmatprep.subr.mxu0 %v707
        %1659 = vmatpush1.msra.mxu0 %v706
        %1660 = vmatprep.subr.mxu0 %v709
        %1661 = vmatpush1.msra.mxu0 %v708
        %1662 = vmatprep.subr.mxu0 %v711
        %1663 = vmatpush1.msra.mxu0 %v710
        %1664 = vmatprep.subr.mxu0 %v713
        %1665 = vmatpush1.msra.mxu0 %v712
        %1666 = vmatprep.subr.mxu0 %v715
        %1667 = vmatpush1.msra.mxu0 %v714
        %1668 = vmatprep.subr.mxu0 %v717
        %1669 = vmatpush1.msra.mxu0 %v716
        %1670 = vmatprep.subr.mxu0 %v719
        %1671 = vmatpush1.msra.mxu0 %v718
        %1672 = vmatprep.subr.mxu0 %v721
        %1673 = vmatpush1.msra.mxu0 %v720
        %1674 = vmatprep.subr.mxu0 %v723
        %1675 = vmatpush1.msra.mxu0 %v722
        %1676 = vmatprep.subr.mxu0 %v725
        %1677 = vmatpush1.msra.mxu0 %v724
        %1678 = vmatprep.subr.mxu0 %v727
        %1679 = vmatpush1.msra.mxu0 %v726
        %1680 = vmatprep.subr.mxu0 %v729
        %1681 = vmatpush1.msra.mxu0 %v728
        %1682 = vmatprep.subr.mxu0 %v731
        %1683 = vmatpush1.msra.mxu0 %v730
        %1684 = vmatprep.subr.mxu0 %v733
        %1685 = vmatpush1.msra.mxu0 %v732
        %1686 = vmatprep.subr.mxu0 %v735
        %1687 = vmatpush1.msra.mxu0 %v734
        %1688 = vmatprep.subr.mxu0 %v737
        %1689 = vmatpush1.msra.mxu0 %v736
        %1690 = vmatprep.mubr.f32.mxu0 %v1590
        %1691 = vmatmul.mubr.f32.gmra.mrb[0].mxu0 %v1623
        %v1692 = vpop.f32.mrb[0].mxu0
        %v1693 = vadd.f32 0.0, %v1692
        %v1694 = vpop.f32.mrb[0].mxu0
        %v1695 = vadd.f32 0.0, %v1694
        %1696 = vdwg.mxu0
        %v1699 = vcombine.low %v1693, %v1695
        %v1701 = vunpack.c.l.s4 1966171168
        %v1702 = vunpack.c.0.s8 %v1701
        %v1703 = vlaneseq
        %v1704 = vshrl.u32 %v1703, 7
        %v1705 = vsub.s32 %v1702, %v1704
        %v1706 = vrot.slane %v1699, %v1705
        %v1708 = vunpack.c.l.s4 1966171168
        %v1709 = vunpack.c.0.s8 %v1708
        %v1710 = vlaneseq
        %v1711 = vshrl.u32 %v1710, 7
        %v1712 = vsub.s32 %v1709, %v1711
        %v1713 = vrot.slane %v1706, %v1712
        %v1715 = vadd.f32 %v1625, %v1713
        %v1716 = vtanh.pop %v1715
        %v1718 = vlaneseq
        %v1719 = vshrl.u32 %v1718, 7
        %v1720 = vsub.s32 1, %v1719
        %v1721 = vrot.slane %v1715, %v1720
        %1723 = vst.msk [vmem:[%s417 + $0x7] sm:$0x1] %vm840, %v1721
        %v1724 = vrot.slane %v1715, 1
        %1725 = vrot.lane.b32.xlu0 %v1724, 127
        %v1726 = vpop.permute.xlu0 %1725
        %s1727 = vtos %v1726
        %s1728 = vtos %v1724
        %p1729 = scmp.gt.f32.partialorder %s1727, %s1728
        %v1730 = vld [vmem:[%s409 + $0x7] sm:$0x1]
        // Predicated region
        $region85: #{tpu_custom_call.1} parent=51 // pred_check
          %p1731 = pneg %p1729
        $region86: #{tpu_custom_call.1} parent=51 // pred_check_branch
          %1733 = sbr.rel (%p1731) target = $region88
        $region87: #{tpu_custom_call.1} parent=51 // pred_region
          %s1734 = scalar_lea.vmem [#allocation11], %s1616
          %1735 = vst [vmem:[%s1734] sm:$0x1] %v1730
        $region88: #{tpu_custom_call.1} parent=51 // pred_fallthru
          _
        %v1736 = vadd.f32 %v1614, %v1730
        %s1737 = scalar_select %p1729, 1, 0
        %v1738 = vstv %s1737
        %vm1739 = vcmp.eq.s32.totalorder %v1738, 1
        %v1740 = vsel %vm1739, %v1736, %v1614
        %s1741 = sadd.s32 %s1616, 1
        %s1742 = scalar_select %p1729, %s1741, %s1616
        %p1743 = scmp.gt.s32.totalorder %s1742, 1
        %s1744 = scalar_select %p1743, %s1742, 1
        %s1745 = scvt.s32.f32 %s1744
        %v1746 = vstv %s1745
        %v1747 = vrcp.pop %v1746
        %v1748 = vmul.f32 %v1740, %v1747
        %v1749 = vsel %vm1739, %v1748, %v1623
        %1750 = vst [vmem:[#allocation2] sm:$0x1] %v1716
        %1751 = vst [vmem:[#allocation3] sm:$0x1] %v1749
        %1752 = vst [vmem:[#allocation4] sm:$0x1] %v1740
        %s1753 = scalar_lea.smem [#allocation5], 0
        %1754 = sst [smem:[%s1753]] %s1742
        %v1755 = vld [vmem:[%s417] sm:$0xff]
        %v1756 = vsel %vm672, %v1755, -inf
        %1757 = vmax.xlane.f32.xlu0 %v1756
        %v1758 = vpop.xlane.xlu0 %1757
        %v1759 = vsub.f32 %v1755, %v1758
        %v1760 = vmul.f32 %v1759, 1.442695
        %v1761 = vpow.pop %v1760
        %v1762 = vsel %vm672, %v1761, 0.0
        %1763 = vadd.xlane.f32.xlu0 %v1762
        %v1764 = vpop.xlane.xlu0 %1763
        %v1765 = vrcp.pop %v1764
        %v1766 = vmul.f32 %v1761, %v1765
        %1767 = vst.msk [vmem:[%s417] sm:$0xff] %vm672, %v1766
        %p1768 = scmp.eq.s32.totalorder %s27, 1
        // Predicated region
        $region89: #{tpu_custom_call.1} parent=51 // pred_check
          %p1769 = pneg %p1768
        $region90: #{tpu_custom_call.1} parent=51 // pred_check_branch
          %1771 = sbr.rel (%p1769) target = $region92
        $region91: #{tpu_custom_call.1} parent=51 // pred_region
          %1772 = vst [vmem:[#allocation7] sm:$0x1] %v1716
          %1773 = vst [vmem:[#allocation9] sm:$0x1] %v1749
          %v1774 = vstv %s1742
          %vm1775 = vcmask 0
          %1776 = vst.msk [vmem:[#allocation12] sm:$0x1] %vm1775, %v1774
        $region92: #{tpu_custom_call.1} parent=51 // pred_fallthru
          _
        %p1777 = scmp.lt.s32.totalorder %s27, 1
        %s1778 = scalar_select %p1777, %s27, 1
        %s1779 = smul.addr %s1778, 8
        %s1780 = scalar_lea.vmem %s12, %s1779
        // Predicated region
        $region93: #{tpu_custom_call.1} parent=51 // pred_check
          %p1781 = pneg %p218
        $region94: #{tpu_custom_call.1} parent=51 // pred_check_branch
          %1783 = sbr.rel (%p1781) target = $region96
        $region95: #{tpu_custom_call.1} parent=51 // pred_region
          %s1785 = ssub.s32 16, 16
          %1786 = vsyncadd [#allocation8], %s1785
          %s1788 = sshll.u32 [#allocation7], 4
          %s1789 = int_to_ptr.vmem [resolvable:$true] %s1788
          %1791 = dma.vmem_to_hbm [thread:$0]  %s1789, 16, %s8, [#allocation8]
        $region96: #{tpu_custom_call.1} parent=51 // pred_fallthru
          _
        // Predicated region
        $region97: #{tpu_custom_call.1} parent=51 // pred_check
          %p1792 = pneg %p239
        $region98: #{tpu_custom_call.1} parent=51 // pred_check_branch
          %1794 = sbr.rel (%p1792) target = $region100
        $region99: #{tpu_custom_call.1} parent=51 // pred_region
          %s1796 = ssub.s32 16, 16
          %1797 = vsyncadd [#allocation10], %s1796
          %s1799 = sshll.u32 [#allocation9], 4
          %s1800 = int_to_ptr.vmem [resolvable:$true] %s1799
          %1802 = dma.vmem_to_hbm [thread:$0]  %s1800, 16, %s9, [#allocation10]
        $region100: #{tpu_custom_call.1} parent=51 // pred_fallthru
          _
        // Predicated region
        $region101: #{tpu_custom_call.1} parent=51 // pred_check
          %p1803 = pneg %p260
        $region102: #{tpu_custom_call.1} parent=51 // pred_check_branch
          %1805 = sbr.rel (%p1803) target = $region104
        $region103: #{tpu_custom_call.1} parent=51 // pred_region
          %s1807 = ssub.s32 384, 384
          %1808 = vsyncadd [#allocation10], %s1807
          %s1809 = sshll.u32 [#allocation11], 4
          %s1810 = int_to_ptr.vmem [resolvable:$true] %s1809
          %1815 = dma.vmem_to_hbm [thread:$0]  %s1810, 384, %s10, [#allocation10], 128, 128, 8
        $region104: #{tpu_custom_call.1} parent=51 // pred_fallthru
          _
        // Predicated region
        $region105: #{tpu_custom_call.1} parent=51 // pred_check
          %p1816 = pneg %p281
        $region106: #{tpu_custom_call.1} parent=51 // pred_check_branch
          %1818 = sbr.rel (%p1816) target = $region108
        $region107: #{tpu_custom_call.1} parent=51 // pred_region
          %s1820 = ssub.s32 16, 16
          %1821 = vsyncadd [#allocation13], %s1820
          %s1823 = sshll.u32 [#allocation12], 4
          %s1824 = int_to_ptr.vmem [resolvable:$true] %s1823
          %1826 = dma.vmem_to_hbm [thread:$0]  %s1824, 16, %s11, [#allocation13]
        $region108: #{tpu_custom_call.1} parent=51 // pred_fallthru
          _
        // Predicated region
        $region109: #{tpu_custom_call.1} parent=51 // pred_check
          %p1827 = pneg %p307
        $region110: #{tpu_custom_call.1} parent=51 // pred_check_branch
          %1829 = sbr.rel (%p1827) target = $region112
        $region111: #{tpu_custom_call.1} parent=51 // pred_region
          _
        $region112: #{tpu_custom_call.1} parent=51 // pred_fallthru
          _
        // Predicated region
        $region113: #{tpu_custom_call.1} parent=51 // pred_check
          %p1830 = pneg %p218
        $region114: #{tpu_custom_call.1} parent=51 // pred_check_branch
          %1832 = sbr.rel (%p1830) target = $region116
        $region115: #{tpu_custom_call.1} parent=51 // pred_region
          %1833 = dma.done [#allocation8], 16
        $region116: #{tpu_custom_call.1} parent=51 // pred_fallthru
          _
        // Predicated region
        $region117: #{tpu_custom_call.1} parent=51 // pred_check
          %p1834 = pneg %p239
        $region118: #{tpu_custom_call.1} parent=51 // pred_check_branch
          %1836 = sbr.rel (%p1834) target = $region120
        $region119: #{tpu_custom_call.1} parent=51 // pred_region
          %1837 = dma.done [#allocation10], 16
        $region120: #{tpu_custom_call.1} parent=51 // pred_fallthru
          _
        // Predicated region
        $region121: #{tpu_custom_call.1} parent=51 // pred_check
          %p1838 = pneg %p260
        $region122: #{tpu_custom_call.1} parent=51 // pred_check_branch
          %1840 = sbr.rel (%p1838) target = $region124
        $region123: #{tpu_custom_call.1} parent=51 // pred_region
          %1841 = dma.done [#allocation10], 384
        $region124: #{tpu_custom_call.1} parent=51 // pred_fallthru
          _
        // Predicated region
        $region125: #{tpu_custom_call.1} parent=51 // pred_check
          %p1842 = pneg %p281
        $region126: #{tpu_custom_call.1} parent=51 // pred_check_branch
          %1844 = sbr.rel (%p1842) target = $region128
        $region127: #{tpu_custom_call.1} parent=51 // pred_region
          %1845 = dma.done [#allocation13], 16
        $region128: #{tpu_custom_call.1} parent=51 // pred_fallthru
          _
      $region52: #{tpu_custom_call.1} parent=5 // pred_fallthru
        _
      %p1846 = scmp.le.s32.totalorder 2, %s22
      // Predicated region
      $region129: #{tpu_custom_call.1} parent=5 // pred_check
        %p1847 = pneg %p1846
      $region130: #{tpu_custom_call.1} parent=5 // pred_check_branch
        %1849 = sbr.rel (%p1847) target = $region132
      $region131: #{tpu_custom_call.1} parent=5 // pred_region
        %s1850 = ssub.s32 %s22, 2
        // Predicated region
        $region133: #{tpu_custom_call.1} parent=131 // pred_check
          %p1851 = pneg %p313
        $region134: #{tpu_custom_call.1} parent=131 // pred_check_branch
          %1853 = sbr.rel (%p1851) target = $region136
        $region135: #{tpu_custom_call.1} parent=131 // pred_region
          %p1854 = scmp.lt.s32.totalorder %s28, 1
          %s1855 = scalar_select %p1854, %s28, 1
          %s1856 = smul.addr %s1855, 8
          %s1857 = scalar_lea.vmem %s12, %s1856
        $region136: #{tpu_custom_call.1} parent=131 // pred_fallthru
          _
      $region132: #{tpu_custom_call.1} parent=5 // pred_fallthru
        _
    $region6: #{tpu_custom_call.1} parent=1 // loop_footer
      %s26 = sadd.s32 1, %s22
    $region7: #{tpu_custom_call.1} parent=1 // loop_footer_branch
      %21 = sbr.rel target = $region3
    $region8: #{tpu_custom_call.1} parent=1 // loop_exit
      _
    %1858 = vsyncpa [#allocation8], 1
    %s1859 = scalar_lea.sflag [#allocation8], 1
    %1860 = vsyncpa %s1859, 1
    %1861 = vsyncpa [#allocation10], 1
    %1862 = vsyncpa [#allocation13], 1

</llo_original>
